<compile_context>
chip_gen: v5e
topology: v5e:2x2
jax: 0.10.0
libtpu: 0.0.40
codegen_flags: <defaults>
</compile_context>

<pallas_src>
import numpy as np
import jax
import jax.numpy as jnp
from jax import lax
from jax.experimental import pallas as pl
from jax.experimental.pallas import tpu as pltpu


_SQRT2 = 1.4142135623730951


def _unroll_for(d):
    # Full unroll for short fixed chains (LLO scheduler visibility), partial otherwise.
    return True if d <= 64 else 8


def _vmem_limit_bytes():
    """Generation-aware VMEM limit: ~48 MiB on v7x (64 MiB/TC), ~96 MiB on v5e/v6e."""
    cap = None
    try:
        info = pltpu.get_tpu_info()
        for name in ("vmem_capacity_bytes", "vmem_size_bytes", "vmem_bytes"):
            v = getattr(info, name, None)
            if v:
                cap = int(v)
                break
    except Exception:
        cap = None
    if not cap:
        cap = 64 * 1024 * 1024  # conservative (v7x per-core) fallback
    return min(int(cap * 3 // 4), 100 * 1024 * 1024)


# ---------------------------------------------------------------------------
# n_mat == 1, kernel 1: build Q = H_0 ... H_{D-1}   (runs once, tiny grid)
# ---------------------------------------------------------------------------
def _build_q_kernel(v_ref, q_ref, u_ref):
    # v_ref: (1, D, D) raw rows; q_ref: (D, D) output; u_ref: (D, D) scratch.
    d = q_ref.shape[0]

    # Hoisted, vectorized normalization; fold the 2.0 into the stored rows:
    #   u_i = sqrt(2) * v_i / (||v_i|| + 1e-6)   =>   2 vn vn^T == u u^T.
    v = v_ref[0]                                                    # (D, D)
    inv = 1.0 / (jnp.sqrt(jnp.sum(v * v, axis=-1, keepdims=True)) + 1e-6)
    u_ref[...] = (v * inv) * _SQRT2

    r = lax.broadcasted_iota(jnp.int32, (d, d), 0)
    c = lax.broadcasted_iota(jnp.int32, (d, d), 1)
    q_ref[...] = (r == c).astype(jnp.float32)

    def body(i, carry):
        ui = u_ref[pl.ds(i, 1), :]                                  # (1, D)
        q = q_ref[...]
        # Serially dependent chain: VPU multiply + lane reduce (no MXU
        # fill/result-FIFO round trip on an N=1 matvec).
        qu = jnp.sum(q * ui, axis=-1, keepdims=True)                # (D, 1)
        q_ref[...] = q - qu * ui                                    # Q <- Q H_i
        return carry

    lax.fori_loop(0, d, body, 0, unroll=_unroll_for(d))


# ---------------------------------------------------------------------------
# n_mat == 1, kernel 2: out_tile = x_tile @ Q^T   (batch-tiled, "parallel")
# ---------------------------------------------------------------------------
def _apply_q_kernel(q_ref, x_ref, o_ref):
    o_ref[...] = lax.dot_general(
        x_ref[...], q_ref[...], (((1,), (1,)), ((), ())),
        preferred_element_type=jnp.float32).astype(o_ref.dtype)


# ---------------------------------------------------------------------------
# n_mat == nbatch, D < 128: direct reflector application, batch on LANES.
#   v_ref: (D_refl, D_feat, bsz), x_ref/o_ref: (D_feat, bsz), s_ref: (D_refl, bsz)
# ---------------------------------------------------------------------------
def _ortho_batched_lane_kernel(v_ref, x_ref, o_ref, s_ref):
    d = v_ref.shape[0]

    # Hoisted normalization: per-(reflector, batch) scale 2 / (||v|| + 1e-6)^2.
    v = v_ref[...]                                                  # (D, D, bsz)
    ssq = jnp.sum(v * v, axis=1)                                    # (D, bsz)
    inv = 1.0 / (jnp.sqrt(ssq) + 1e-6)
    s_ref[...] = 2.0 * inv * inv

    # out[b] = H_0 ... H_{D-1} x[b]  ->  apply reflectors in reverse order,
    # keeping y = (D_feat, bsz) live in vregs across the (unrolled) chain.
    def body(j, y):
        i = d - 1 - j
        vi = v_ref[i]                                               # (D_feat, bsz)
        si = s_ref[pl.ds(i, 1), :]                                  # (1, bsz)
        dot = jnp.sum(vi * y, axis=0, keepdims=True)                # (1, bsz)
        return y - (si * dot) * vi

    y = lax.fori_loop(0, d, body, x_ref[...], unroll=_unroll_for(d))
    o_ref[...] = y.astype(o_ref.dtype)


# ---------------------------------------------------------------------------
# n_mat == nbatch, D >= 128: direct reflector application, feature on LANES.
#   v_ref: (D_refl, bsz, D_feat), x_ref/o_ref: (bsz, D_feat)
# ---------------------------------------------------------------------------
def _ortho_batched_sublane_kernel(v_ref, x_ref, o_ref):
    d = v_ref.shape[0]

    def body(j, y):
        i = d - 1 - j
        vi = v_ref[i]                                               # (bsz, D)
        ssq = jnp.sum(vi * vi, axis=-1, keepdims=True)              # (bsz, 1)
        inv = 1.0 / (jnp.sqrt(ssq) + 1e-6)
        dot = jnp.sum(vi * y, axis=-1, keepdims=True)               # (bsz, 1)
        return y - ((2.0 * inv * inv) * dot) * vi

    y = lax.fori_loop(0, d, body, x_ref[...], unroll=_unroll_for(d))
    o_ref[...] = y.astype(o_ref.dtype)


# ---------------------------------------------------------------------------
# Tile sizing (counts double-buffered input blocks, not just scratch)
# ---------------------------------------------------------------------------
def _pick_batch_tile(nbatch, d, vmem_limit):
    # 2x double-buffered x tile + 2x out tile (16*tb*d bytes) + Q (2*d*d*4).
    budget = int(vmem_limit * 0.8) - 2 * d * d * 4
    cap = max(8, budget // (16 * d))
    tb = min(nbatch, 2048, cap)
    if tb < nbatch:
        tb = max(8, (tb // 8) * 8)          # (8,128) rule on the sublane dim
    return tb


def _pick_group_block_lane(n_mat, d, vmem_limit):
    # 2x double-buffered (D,D,bsz) slab + loaded value + v*v temp + small refs.
    per_elem = 4 * (4 * d * d + 8 * d)
    cap = max(1, int(vmem_limit * 0.8) // per_elem)
    if n_mat <= min(cap, 1024):
        return n_mat                         # single (full) block
    return max(128, (min(cap, 1024) // 128) * 128)   # lane-dense blocks


def _pick_group_block_sublane(n_mat, d, vmem_limit):
    # 2x double-buffered (D,bsz,D) slab dominates; normalization is per-step
    # here, so no block-sized temporaries.
    per_elem = 4 * (2 * d * d + 6 * d)
    cap = max(1, int(vmem_limit * 0.8) // per_elem)
    if n_mat <= min(cap, 256):
        return n_mat
    return max(8, (min(cap, 256) // 8) * 8)


# ---------------------------------------------------------------------------
# Wrapper
# ---------------------------------------------------------------------------
def ortho_hh_forward(x, hd_vecs):
    """Pallas implementation of OrthoHH.forward."""
    n_mat, d, d2 = hd_vecs.shape
    assert d == d2
    nbatch = x.shape[0]
    x2 = x.reshape(nbatch, -1).astype(jnp.float32)
    assert x2.shape[1] == d, "flattened feature dim must equal feature_dim"
    hd = hd_vecs.astype(jnp.float32)
    vmem_limit = _vmem_limit_bytes()

    if n_mat == 1:
        # ---- kernel 1: build Q once (tiny, sequential) --------------------
        q = pl.pallas_call(
            _build_q_kernel,
            out_shape=jax.ShapeDtypeStruct((d, d), jnp.float32),
            grid_spec=pltpu.PrefetchScalarGridSpec(
                num_scalar_prefetch=0,
                grid=(1,),
                in_specs=[pl.BlockSpec((1, d, d), lambda i: (0, 0, 0))],
                out_specs=pl.BlockSpec((d, d), lambda i: (0, 0)),
                scratch_shapes=[pltpu.VMEM((d, d), jnp.float32)]),   # u rows
            compiler_params=pltpu.CompilerParams(
                dimension_semantics=("arbitrary",),
                vmem_limit_bytes=vmem_limit),
        )(hd)

        # ---- kernel 2: out = x @ Q^T, large batch tiles, megacore-parallel -
        tb = _pick_batch_tile(nbatch, d, vmem_limit)
        return pl.pallas_call(
            _apply_q_kernel,
            out_shape=jax.ShapeDtypeStruct((nbatch, d), jnp.float32),
            grid_spec=pltpu.PrefetchScalarGridSpec(
                num_scalar_prefetch=0,
                grid=(pl.cdiv(nbatch, tb),),
                in_specs=[pl.BlockSpec((d, d), lambda i: (0, 0)),
                          pl.BlockSpec((tb, d), lambda i: (i, 0))],
                out_specs=pl.BlockSpec((tb, d), lambda i: (i, 0))),
            compiler_params=pltpu.CompilerParams(
                dimension_semantics=("parallel",),
                vmem_limit_bytes=vmem_limit),
        )(q, x2)

    assert n_mat == nbatch, "numbers of mat does not match batch size!!!"

    if d < 128:
        # Lane-dense layout: reflector-leading, batch-last. Single layout pass
        # over the weights. TODO(synk): keep the parameter pre-transposed.
        bsz = _pick_group_block_lane(n_mat, d, vmem_limit)
        v_t = jnp.transpose(hd, (1, 2, 0))                 # (D_refl, D_feat, n_mat)
        x_t = x2.T                                         # (D_feat, nbatch)
        out_t = pl.pallas_call(
            _ortho_batched_lane_kernel,
            out_shape=jax.ShapeDtypeStruct((d, nbatch), jnp.float32),
            grid_spec=pltpu.PrefetchScalarGridSpec(
                num_scalar_prefetch=0,
                grid=(pl.cdiv(n_mat, bsz),),
                in_specs=[pl.BlockSpec((d, d, bsz), lambda i: (0, 0, i)),
                          pl.BlockSpec((d, bsz), lambda i: (0, i))],
                out_specs=pl.BlockSpec((d, bsz), lambda i: (0, i)),
                scratch_shapes=[pltpu.VMEM((d, bsz), jnp.float32)]),  # scales
            compiler_params=pltpu.CompilerParams(
                dimension_semantics=("parallel",),
                vmem_limit_bytes=vmem_limit),
        )(v_t, x_t)
        return out_t.T                                     # tiny (nbatch, D) transpose

    # D >= 128: feature axis is already lane-dense; batch goes on sublanes.
    bsz = _pick_group_block_sublane(n_mat, d, vmem_limit)
    v_t = jnp.transpose(hd, (1, 0, 2))                     # (D_refl, n_mat, D_feat)
    return pl.pallas_call(
        _ortho_batched_sublane_kernel,
        out_shape=jax.ShapeDtypeStruct((nbatch, d), jnp.float32),
        grid_spec=pltpu.PrefetchScalarGridSpec(
            num_scalar_prefetch=0,
            grid=(pl.cdiv(n_mat, bsz),),
            in_specs=[pl.BlockSpec((d, bsz, d), lambda i: (0, i, 0)),
                      pl.BlockSpec((bsz, d), lambda i: (i, 0))],
            out_specs=pl.BlockSpec((bsz, d), lambda i: (i, 0))),
        compiler_params=pltpu.CompilerParams(
            dimension_semantics=("parallel",),
            vmem_limit_bytes=vmem_limit),
    )(v_t, x2)


# ---------------------------------------------------------------------------
# Pure-JAX reference (mirrors the PyTorch forward)
# ---------------------------------------------------------------------------
def ortho_hh_reference(x, hd_vecs):
    n_mat, d, _ = hd_vecs.shape
    x2 = x.reshape(x.shape[0], -1).astype(jnp.float32)
    hd = hd_vecs.astype(jnp.float32)

    def build_q(V):  # V: (d, d) raw rows
        def step(Q, v):
            v = v / (jnp.linalg.norm(v) + 1e-6)
            Qi = jnp.eye(d, dtype=jnp.float32) - 2.0 * jnp.outer(v, v)
            return Q @ Qi, None
        Q, _ = lax.scan(step, jnp.eye(d, dtype=jnp.float32), V)
        return Q

    if n_mat == 1:
        Q = build_q(hd[0])
        return x2 @ Q.T
    Qs = jax.vmap(build_q)(hd)
    return jnp.einsum('bij,bj->bi', Qs, x2)


if __name__ == "__main__":
    key = jax.random.PRNGKey(0)
    k1, k2, k3 = jax.random.split(key, 3)

    # --- Case 1: n_mat = 1 (shared Q applied to whole batch) ---------------
    d1, nb1 = 32, 8
    rs1 = np.random.RandomState(seed=0)                     # matches module __init__
    hd1 = jnp.asarray(rs1.randn(1, d1, d1), dtype=jnp.float32)
    x1 = jax.random.normal(k1, (nb1, d1), dtype=jnp.float32)
    out1 = jax.block_until_ready(ortho_hh_forward(x1, hd1))
    ref1 = ortho_hh_reference(x1, hd1)
    assert out1.shape == (nb1, d1)
    np.testing.assert_allclose(np.asarray(out1), np.asarray(ref1), rtol=1e-4, atol=1e-4)

    # --- Case 2: n_mat == nbatch, D < 128 (lane-dense batched path) --------
    d2_, nm2 = 32, 4
    rs2 = np.random.RandomState(seed=0)
    hd2 = jnp.asarray(rs2.randn(nm2, d2_, d2_), dtype=jnp.float32)
    x2 = jax.random.normal(k2, (nm2, d2_), dtype=jnp.float32)
    out2 = jax.block_until_ready(ortho_hh_forward(x2, hd2))
    ref2 = ortho_hh_reference(x2, hd2)
    assert out2.shape == (nm2, d2_)
    np.testing.assert_allclose(np.asarray(out2), np.asarray(ref2), rtol=1e-4, atol=1e-4)

    # --- Case 3: n_mat == nbatch, D >= 128 (sublane-layout batched path) ---
    d3, nm3 = 128, 4
    rs3 = np.random.RandomState(seed=1)
    hd3 = jnp.asarray(rs3.randn(nm3, d3, d3), dtype=jnp.float32)
    x3 = jax.random.normal(k3, (nm3, d3), dtype=jnp.float32)
    out3 = jax.block_until_ready(ortho_hh_forward(x3, hd3))
    ref3 = ortho_hh_reference(x3, hd3)
    assert out3.shape == (nm3, d3)
    # Slightly looser tolerance: 128 compounded f32 reflections.
    np.testing.assert_allclose(np.asarray(out3), np.asarray(ref3), rtol=2e-4, atol=2e-4)

    print("KERNEL_OK")
</pallas_src>

<mosaic_0001>
module attributes {stable_mosaic.version = 11 : i64} {
  func.func @_build_q_kernel(%arg0: i32, %arg1: memref<1x32x32xf32, #tpu.memory_space<vmem>>, %arg2: memref<32x32xf32, #tpu.memory_space<vmem>>, %arg3: memref<32x32xf32, #tpu.memory_space<vmem>>) attributes {dimension_semantics = [#tpu.dimension_semantics<arbitrary>], iteration_bounds = array<i64: 1>, scalar_prefetch = 0 : i64, scratch_operands = 1 : i64, tpu.core_type = #tpu.core_type<tc>, window_params = [{pipeline_mode = #tpu.pipeline_mode<synchronous>, transform_indices = @transform_0, window_bounds = array<i64: 1, 32, 32>}, {pipeline_mode = #tpu.pipeline_mode<synchronous>, transform_indices = @transform_1, window_bounds = array<i64: 32, 32>}]} {
    %c0 = arith.constant 0 : index
    %c0_0 = arith.constant 0 : index
    %c0_1 = arith.constant 0 : index
    %0 = vector.load %arg1[%c0, %c0_0, %c0_1] : memref<1x32x32xf32, #tpu.memory_space<vmem>>, vector<1x32x32xf32>
    %1 = vector.shape_cast %0 : vector<1x32x32xf32> to vector<32x32xf32>
    %2 = arith.mulf %1, %1 : vector<32x32xf32>
    %cst = arith.constant dense<0.000000e+00> : vector<32xf32>
    %3 = vector.multi_reduction <add>, %2, %cst [1] : vector<32x32xf32> to vector<32xf32>
    %4 = vector.shape_cast %3 : vector<32xf32> to vector<32x1xf32>
    %5 = math.sqrt %4 : vector<32x1xf32>
    %cst_2 = arith.constant 9.99999997E-7 : f32
    %6 = vector.broadcast %cst_2 : f32 to vector<32x1xf32>
    %7 = arith.addf %5, %6 : vector<32x1xf32>
    %cst_3 = arith.constant 1.000000e+00 : f32
    %8 = vector.broadcast %cst_3 : f32 to vector<32x1xf32>
    %9 = arith.divf %8, %7 : vector<32x1xf32>
    %10 = vector.broadcast %9 : vector<32x1xf32> to vector<32x32xf32>
    %11 = arith.mulf %1, %10 : vector<32x32xf32>
    %cst_4 = arith.constant 1.41421354 : f32
    %12 = vector.broadcast %cst_4 : f32 to vector<32x32xf32>
    %13 = arith.mulf %11, %12 : vector<32x32xf32>
    %c0_5 = arith.constant 0 : index
    %c0_6 = arith.constant 0 : index
    %14 = vector.load %arg3[%c0_5, %c0_6] : memref<32x32xf32, #tpu.memory_space<vmem>>, vector<32x32xf32>
    tpu.vector_store %arg3[%c0_5, %c0_6], %13 {strides = array<i32>} : memref<32x32xf32, #tpu.memory_space<vmem>>, vector<32x32xf32>,
    %15 = tpu.iota {dimensions = array<i32: 0>} : vector<32x32xi32>
    %16 = tpu.iota {dimensions = array<i32: 1>} : vector<32x32xi32>
    %17 = arith.cmpi eq, %15, %16 : vector<32x32xi32>
    %18 = arith.extui %17 : vector<32x32xi1> to vector<32x32xi32>
    %19 = arith.sitofp %18 : vector<32x32xi32> to vector<32x32xf32>
    %c0_7 = arith.constant 0 : index
    %c0_8 = arith.constant 0 : index
    %20 = vector.load %arg2[%c0_7, %c0_8] : memref<32x32xf32, #tpu.memory_space<vmem>>, vector<32x32xf32>
    tpu.vector_store %arg2[%c0_7, %c0_8], %19 {strides = array<i32>} : memref<32x32xf32, #tpu.memory_space<vmem>>, vector<32x32xf32>,
    %c0_i32 = arith.constant 0 : i32
    %21 = arith.index_cast %c0_i32 : i32 to index
    %c0_9 = arith.constant 0 : index
    %22 = vector.load %arg3[%21, %c0_9] : memref<32x32xf32, #tpu.memory_space<vmem>>, vector<1x32xf32>
    %c0_10 = arith.constant 0 : index
    %c0_11 = arith.constant 0 : index
    %23 = vector.load %arg2[%c0_10, %c0_11] : memref<32x32xf32, #tpu.memory_space<vmem>>, vector<32x32xf32>
    %24 = vector.broadcast %22 : vector<1x32xf32> to vector<32x32xf32>
    %25 = arith.mulf %23, %24 : vector<32x32xf32>
    %cst_12 = arith.constant dense<0.000000e+00> : vector<32xf32>
    %26 = vector.multi_reduction <add>, %25, %cst_12 [1] : vector<32x32xf32> to vector<32xf32>
    %27 = vector.shape_cast %26 : vector<32xf32> to vector<32x1xf32>
    %28 = vector.broadcast %27 : vector<32x1xf32> to vector<32x32xf32>
    %29 = vector.broadcast %22 : vector<1x32xf32> to vector<32x32xf32>
    %30 = arith.mulf %28, %29 : vector<32x32xf32>
    %31 = arith.subf %23, %30 : vector<32x32xf32>
    %c0_13 = arith.constant 0 : index
    %c0_14 = arith.constant 0 : index
    %32 = vector.load %arg2[%c0_13, %c0_14] : memref<32x32xf32, #tpu.memory_space<vmem>>, vector<32x32xf32>
    tpu.vector_store %arg2[%c0_13, %c0_14], %31 {strides = array<i32>} : memref<32x32xf32, #tpu.memory_space<vmem>>, vector<32x32xf32>,
    %c1_i32 = arith.constant 1 : i32
    %33 = arith.index_cast %c1_i32 : i32 to index
    %c0_15 = arith.constant 0 : index
    %34 = vector.load %arg3[%33, %c0_15] : memref<32x32xf32, #tpu.memory_space<vmem>>, vector<1x32xf32>
    %c0_16 = arith.constant 0 : index
    %c0_17 = arith.constant 0 : index
    %35 = vector.load %arg2[%c0_16, %c0_17] : memref<32x32xf32, #tpu.memory_space<vmem>>, vector<32x32xf32>
    %36 = vector.broadcast %34 : vector<1x32xf32> to vector<32x32xf32>
    %37 = arith.mulf %35, %36 : vector<32x32xf32>
    %cst_18 = arith.constant dense<0.000000e+00> : vector<32xf32>
    %38 = vector.multi_reduction <add>, %37, %cst_18 [1] : vector<32x32xf32> to vector<32xf32>
    %39 = vector.shape_cast %38 : vector<32xf32> to vector<32x1xf32>
    %40 = vector.broadcast %39 : vector<32x1xf32> to vector<32x32xf32>
    %41 = vector.broadcast %34 : vector<1x32xf32> to vector<32x32xf32>
    %42 = arith.mulf %40, %41 : vector<32x32xf32>
    %43 = arith.subf %35, %42 : vector<32x32xf32>
    %c0_19 = arith.constant 0 : index
    %c0_20 = arith.constant 0 : index
    %44 = vector.load %arg2[%c0_19, %c0_20] : memref<32x32xf32, #tpu.memory_space<vmem>>, vector<32x32xf32>
    tpu.vector_store %arg2[%c0_19, %c0_20], %43 {strides = array<i32>} : memref<32x32xf32, #tpu.memory_space<vmem>>, vector<32x32xf32>,
    %c2_i32 = arith.constant 2 : i32
    %45 = arith.index_cast %c2_i32 : i32 to index
    %c0_21 = arith.constant 0 : index
    %46 = vector.load %arg3[%45, %c0_21] : memref<32x32xf32, #tpu.memory_space<vmem>>, vector<1x32xf32>
    %c0_22 = arith.constant 0 : index
    %c0_23 = arith.constant 0 : index
    %47 = vector.load %arg2[%c0_22, %c0_23] : memref<32x32xf32, #tpu.memory_space<vmem>>, vector<32x32xf32>
    %48 = vector.broadcast %46 : vector<1x32xf32> to vector<32x32xf32>
    %49 = arith.mulf %47, %48 : vector<32x32xf32>
    %cst_24 = arith.constant dense<0.000000e+00> : vector<32xf32>
    %50 = vector.multi_reduction <add>, %49, %cst_24 [1] : vector<32x32xf32> to vector<32xf32>
    %51 = vector.shape_cast %50 : vector<32xf32> to vector<32x1xf32>
    %52 = vector.broadcast %51 : vector<32x1xf32> to vector<32x32xf32>
    %53 = vector.broadcast %46 : vector<1x32xf32> to vector<32x32xf32>
    %54 = arith.mulf %52, %53 : vector<32x32xf32>
    %55 = arith.subf %47, %54 : vector<32x32xf32>
    %c0_25 = arith.constant 0 : index
    %c0_26 = arith.constant 0 : index
    %56 = vector.load %arg2[%c0_25, %c0_26] : memref<32x32xf32, #tpu.memory_space<vmem>>, vector<32x32xf32>
    tpu.vector_store %arg2[%c0_25, %c0_26], %55 {strides = array<i32>} : memref<32x32xf32, #tpu.memory_space<vmem>>, vector<32x32xf32>,
    %c3_i32 = arith.constant 3 : i32
    %57 = arith.index_cast %c3_i32 : i32 to index
    %c0_27 = arith.constant 0 : index
    %58 = vector.load %arg3[%57, %c0_27] : memref<32x32xf32, #tpu.memory_space<vmem>>, vector<1x32xf32>
    %c0_28 = arith.constant 0 : index
    %c0_29 = arith.constant 0 : index
    %59 = vector.load %arg2[%c0_28, %c0_29] : memref<32x32xf32, #tpu.memory_space<vmem>>, vector<32x32xf32>
    %60 = vector.broadcast %58 : vector<1x32xf32> to vector<32x32xf32>
    %61 = arith.mulf %59, %60 : vector<32x32xf32>
    %cst_30 = arith.constant dense<0.000000e+00> : vector<32xf32>
    %62 = vector.multi_reduction <add>, %61, %cst_30 [1] : vector<32x32xf32> to vector<32xf32>
    %63 = vector.shape_cast %62 : vector<32xf32> to vector<32x1xf32>
    %64 = vector.broadcast %63 : vector<32x1xf32> to vector<32x32xf32>
    %65 = vector.broadcast %58 : vector<1x32xf32> to vector<32x32xf32>
    %66 = arith.mulf %64, %65 : vector<32x32xf32>
    %67 = arith.subf %59, %66 : vector<32x32xf32>
    %c0_31 = arith.constant 0 : index
    %c0_32 = arith.constant 0 : index
    %68 = vector.load %arg2[%c0_31, %c0_32] : memref<32x32xf32, #tpu.memory_space<vmem>>, vector<32x32xf32>
    tpu.vector_store %arg2[%c0_31, %c0_32], %67 {strides = array<i32>} : memref<32x32xf32, #tpu.memory_space<vmem>>, vector<32x32xf32>,
    %c4_i32 = arith.constant 4 : i32
    %69 = arith.index_cast %c4_i32 : i32 to index
    %c0_33 = arith.constant 0 : index
    %70 = vector.load %arg3[%69, %c0_33] : memref<32x32xf32, #tpu.memory_space<vmem>>, vector<1x32xf32>
    %c0_34 = arith.constant 0 : index
    %c0_35 = arith.constant 0 : index
    %71 = vector.load %arg2[%c0_34, %c0_35] : memref<32x32xf32, #tpu.memory_space<vmem>>, vector<32x32xf32>
    %72 = vector.broadcast %70 : vector<1x32xf32> to vector<32x32xf32>
    %73 = arith.mulf %71, %72 : vector<32x32xf32>
    %cst_36 = arith.constant dense<0.000000e+00> : vector<32xf32>
    %74 = vector.multi_reduction <add>, %73, %cst_36 [1] : vector<32x32xf32> to vector<32xf32>
    %75 = vector.shape_cast %74 : vector<32xf32> to vector<32x1xf32>
    %76 = vector.broadcast %75 : vector<32x1xf32> to vector<32x32xf32>
    %77 = vector.broadcast %70 : vector<1x32xf32> to vector<32x32xf32>
    %78 = arith.mulf %76, %77 : vector<32x32xf32>
    %79 = arith.subf %71, %78 : vector<32x32xf32>
    %c0_37 = arith.constant 0 : index
    %c0_38 = arith.constant 0 : index
    %80 = vector.load %arg2[%c0_37, %c0_38] : memref<32x32xf32, #tpu.memory_space<vmem>>, vector<32x32xf32>
    tpu.vector_store %arg2[%c0_37, %c0_38], %79 {strides = array<i32>} : memref<32x32xf32, #tpu.memory_space<vmem>>, vector<32x32xf32>,
    %c5_i32 = arith.constant 5 : i32
    %81 = arith.index_cast %c5_i32 : i32 to index
    %c0_39 = arith.constant 0 : index
    %82 = vector.load %arg3[%81, %c0_39] : memref<32x32xf32, #tpu.memory_space<vmem>>, vector<1x32xf32>
    %c0_40 = arith.constant 0 : index
    %c0_41 = arith.constant 0 : index
    %83 = vector.load %arg2[%c0_40, %c0_41] : memref<32x32xf32, #tpu.memory_space<vmem>>, vector<32x32xf32>
    %84 = vector.broadcast %82 : vector<1x32xf32> to vector<32x32xf32>
    %85 = arith.mulf %83, %84 : vector<32x32xf32>
    %cst_42 = arith.constant dense<0.000000e+00> : vector<32xf32>
    %86 = vector.multi_reduction <add>, %85, %cst_42 [1] : vector<32x32xf32> to vector<32xf32>
    %87 = vector.shape_cast %86 : vector<32xf32> to vector<32x1xf32>
    %88 = vector.broadcast %87 : vector<32x1xf32> to vector<32x32xf32>
    %89 = vector.broadcast %82 : vector<1x32xf32> to vector<32x32xf32>
    %90 = arith.mulf %88, %89 : vector<32x32xf32>
    %91 = arith.subf %83, %90 : vector<32x32xf32>
    %c0_43 = arith.constant 0 : index
    %c0_44 = arith.constant 0 : index
    %92 = vector.load %arg2[%c0_43, %c0_44] : memref<32x32xf32, #tpu.memory_space<vmem>>, vector<32x32xf32>
    tpu.vector_store %arg2[%c0_43, %c0_44], %91 {strides = array<i32>} : memref<32x32xf32, #tpu.memory_space<vmem>>, vector<32x32xf32>,
    %c6_i32 = arith.constant 6 : i32
    %93 = arith.index_cast %c6_i32 : i32 to index
    %c0_45 = arith.constant 0 : index
    %94 = vector.load %arg3[%93, %c0_45] : memref<32x32xf32, #tpu.memory_space<vmem>>, vector<1x32xf32>
    %c0_46 = arith.constant 0 : index
    %c0_47 = arith.constant 0 : index
    %95 = vector.load %arg2[%c0_46, %c0_47] : memref<32x32xf32, #tpu.memory_space<vmem>>, vector<32x32xf32>
    %96 = vector.broadcast %94 : vector<1x32xf32> to vector<32x32xf32>
    %97 = arith.mulf %95, %96 : vector<32x32xf32>
    %cst_48 = arith.constant dense<0.000000e+00> : vector<32xf32>
    %98 = vector.multi_reduction <add>, %97, %cst_48 [1] : vector<32x32xf32> to vector<32xf32>
    %99 = vector.shape_cast %98 : vector<32xf32> to vector<32x1xf32>
    %100 = vector.broadcast %99 : vector<32x1xf32> to vector<32x32xf32>
    %101 = vector.broadcast %94 : vector<1x32xf32> to vector<32x32xf32>
    %102 = arith.mulf %100, %101 : vector<32x32xf32>
    %103 = arith.subf %95, %102 : vector<32x32xf32>
    %c0_49 = arith.constant 0 : index
    %c0_50 = arith.constant 0 : index
    %104 = vector.load %arg2[%c0_49, %c0_50] : memref<32x32xf32, #tpu.memory_space<vmem>>, vector<32x32xf32>
    tpu.vector_store %arg2[%c0_49, %c0_50], %103 {strides = array<i32>} : memref<32x32xf32, #tpu.memory_space<vmem>>, vector<32x32xf32>,
    %c7_i32 = arith.constant 7 : i32
    %105 = arith.index_cast %c7_i32 : i32 to index
    %c0_51 = arith.constant 0 : index
    %106 = vector.load %arg3[%105, %c0_51] : memref<32x32xf32, #tpu.memory_space<vmem>>, vector<1x32xf32>
    %c0_52 = arith.constant 0 : index
    %c0_53 = arith.constant 0 : index
    %107 = vector.load %arg2[%c0_52, %c0_53] : memref<32x32xf32, #tpu.memory_space<vmem>>, vector<32x32xf32>
    %108 = vector.broadcast %106 : vector<1x32xf32> to vector<32x32xf32>
    %109 = arith.mulf %107, %108 : vector<32x32xf32>
    %cst_54 = arith.constant dense<0.000000e+00> : vector<32xf32>
    %110 = vector.multi_reduction <add>, %109, %cst_54 [1] : vector<32x32xf32> to vector<32xf32>
    %111 = vector.shape_cast %110 : vector<32xf32> to vector<32x1xf32>
    %112 = vector.broadcast %111 : vector<32x1xf32> to vector<32x32xf32>
    %113 = vector.broadcast %106 : vector<1x32xf32> to vector<32x32xf32>
    %114 = arith.mulf %112, %113 : vector<32x32xf32>
    %115 = arith.subf %107, %114 : vector<32x32xf32>
    %c0_55 = arith.constant 0 : index
    %c0_56 = arith.constant 0 : index
    %116 = vector.load %arg2[%c0_55, %c0_56] : memref<32x32xf32, #tpu.memory_space<vmem>>, vector<32x32xf32>
    tpu.vector_store %arg2[%c0_55, %c0_56], %115 {strides = array<i32>} : memref<32x32xf32, #tpu.memory_space<vmem>>, vector<32x32xf32>,
    %c8_i32 = arith.constant 8 : i32
    %117 = arith.index_cast %c8_i32 : i32 to index
    %c0_57 = arith.constant 0 : index
    %118 = vector.load %arg3[%117, %c0_57] : memref<32x32xf32, #tpu.memory_space<vmem>>, vector<1x32xf32>
    %c0_58 = arith.constant 0 : index
    %c0_59 = arith.constant 0 : index
    %119 = vector.load %arg2[%c0_58, %c0_59] : memref<32x32xf32, #tpu.memory_space<vmem>>, vector<32x32xf32>
    %120 = vector.broadcast %118 : vector<1x32xf32> to vector<32x32xf32>
    %121 = arith.mulf %119, %120 : vector<32x32xf32>
    %cst_60 = arith.constant dense<0.000000e+00> : vector<32xf32>
    %122 = vector.multi_reduction <add>, %121, %cst_60 [1] : vector<32x32xf32> to vector<32xf32>
    %123 = vector.shape_cast %122 : vector<32xf32> to vector<32x1xf32>
    %124 = vector.broadcast %123 : vector<32x1xf32> to vector<32x32xf32>
    %125 = vector.broadcast %118 : vector<1x32xf32> to vector<32x32xf32>
    %126 = arith.mulf %124, %125 : vector<32x32xf32>
    %127 = arith.subf %119, %126 : vector<32x32xf32>
    %c0_61 = arith.constant 0 : index
    %c0_62 = arith.constant 0 : index
    %128 = vector.load %arg2[%c0_61, %c0_62] : memref<32x32xf32, #tpu.memory_space<vmem>>, vector<32x32xf32>
    tpu.vector_store %arg2[%c0_61, %c0_62], %127 {strides = array<i32>} : memref<32x32xf32, #tpu.memory_space<vmem>>, vector<32x32xf32>,
    %c9_i32 = arith.constant 9 : i32
    %129 = arith.index_cast %c9_i32 : i32 to index
    %c0_63 = arith.constant 0 : index
    %130 = vector.load %arg3[%129, %c0_63] : memref<32x32xf32, #tpu.memory_space<vmem>>, vector<1x32xf32>
    %c0_64 = arith.constant 0 : index
    %c0_65 = arith.constant 0 : index
    %131 = vector.load %arg2[%c0_64, %c0_65] : memref<32x32xf32, #tpu.memory_space<vmem>>, vector<32x32xf32>
    %132 = vector.broadcast %130 : vector<1x32xf32> to vector<32x32xf32>
    %133 = arith.mulf %131, %132 : vector<32x32xf32>
    %cst_66 = arith.constant dense<0.000000e+00> : vector<32xf32>
    %134 = vector.multi_reduction <add>, %133, %cst_66 [1] : vector<32x32xf32> to vector<32xf32>
    %135 = vector.shape_cast %134 : vector<32xf32> to vector<32x1xf32>
    %136 = vector.broadcast %135 : vector<32x1xf32> to vector<32x32xf32>
    %137 = vector.broadcast %130 : vector<1x32xf32> to vector<32x32xf32>
    %138 = arith.mulf %136, %137 : vector<32x32xf32>
    %139 = arith.subf %131, %138 : vector<32x32xf32>
    %c0_67 = arith.constant 0 : index
    %c0_68 = arith.constant 0 : index
    %140 = vector.load %arg2[%c0_67, %c0_68] : memref<32x32xf32, #tpu.memory_space<vmem>>, vector<32x32xf32>
    tpu.vector_store %arg2[%c0_67, %c0_68], %139 {strides = array<i32>} : memref<32x32xf32, #tpu.memory_space<vmem>>, vector<32x32xf32>,
    %c10_i32 = arith.constant 10 : i32
    %141 = arith.index_cast %c10_i32 : i32 to index
    %c0_69 = arith.constant 0 : index
    %142 = vector.load %arg3[%141, %c0_69] : memref<32x32xf32, #tpu.memory_space<vmem>>, vector<1x32xf32>
    %c0_70 = arith.constant 0 : index
    %c0_71 = arith.constant 0 : index
    %143 = vector.load %arg2[%c0_70, %c0_71] : memref<32x32xf32, #tpu.memory_space<vmem>>, vector<32x32xf32>
    %144 = vector.broadcast %142 : vector<1x32xf32> to vector<32x32xf32>
    %145 = arith.mulf %143, %144 : vector<32x32xf32>
    %cst_72 = arith.constant dense<0.000000e+00> : vector<32xf32>
    %146 = vector.multi_reduction <add>, %145, %cst_72 [1] : vector<32x32xf32> to vector<32xf32>
    %147 = vector.shape_cast %146 : vector<32xf32> to vector<32x1xf32>
    %148 = vector.broadcast %147 : vector<32x1xf32> to vector<32x32xf32>
    %149 = vector.broadcast %142 : vector<1x32xf32> to vector<32x32xf32>
    %150 = arith.mulf %148, %149 : vector<32x32xf32>
    %151 = arith.subf %143, %150 : vector<32x32xf32>
    %c0_73 = arith.constant 0 : index
    %c0_74 = arith.constant 0 : index
    %152 = vector.load %arg2[%c0_73, %c0_74] : memref<32x32xf32, #tpu.memory_space<vmem>>, vector<32x32xf32>
    tpu.vector_store %arg2[%c0_73, %c0_74], %151 {strides = array<i32>} : memref<32x32xf32, #tpu.memory_space<vmem>>, vector<32x32xf32>,
    %c11_i32 = arith.constant 11 : i32
    %153 = arith.index_cast %c11_i32 : i32 to index
    %c0_75 = arith.constant 0 : index
    %154 = vector.load %arg3[%153, %c0_75] : memref<32x32xf32, #tpu.memory_space<vmem>>, vector<1x32xf32>
    %c0_76 = arith.constant 0 : index
    %c0_77 = arith.constant 0 : index
    %155 = vector.load %arg2[%c0_76, %c0_77] : memref<32x32xf32, #tpu.memory_space<vmem>>, vector<32x32xf32>
    %156 = vector.broadcast %154 : vector<1x32xf32> to vector<32x32xf32>
    %157 = arith.mulf %155, %156 : vector<32x32xf32>
    %cst_78 = arith.constant dense<0.000000e+00> : vector<32xf32>
    %158 = vector.multi_reduction <add>, %157, %cst_78 [1] : vector<32x32xf32> to vector<32xf32>
    %159 = vector.shape_cast %158 : vector<32xf32> to vector<32x1xf32>
    %160 = vector.broadcast %159 : vector<32x1xf32> to vector<32x32xf32>
    %161 = vector.broadcast %154 : vector<1x32xf32> to vector<32x32xf32>
    %162 = arith.mulf %160, %161 : vector<32x32xf32>
    %163 = arith.subf %155, %162 : vector<32x32xf32>
    %c0_79 = arith.constant 0 : index
    %c0_80 = arith.constant 0 : index
    %164 = vector.load %arg2[%c0_79, %c0_80] : memref<32x32xf32, #tpu.memory_space<vmem>>, vector<32x32xf32>
    tpu.vector_store %arg2[%c0_79, %c0_80], %163 {strides = array<i32>} : memref<32x32xf32, #tpu.memory_space<vmem>>, vector<32x32xf32>,
    %c12_i32 = arith.constant 12 : i32
    %165 = arith.index_cast %c12_i32 : i32 to index
    %c0_81 = arith.constant 0 : index
    %166 = vector.load %arg3[%165, %c0_81] : memref<32x32xf32, #tpu.memory_space<vmem>>, vector<1x32xf32>
    %c0_82 = arith.constant 0 : index
    %c0_83 = arith.constant 0 : index
    %167 = vector.load %arg2[%c0_82, %c0_83] : memref<32x32xf32, #tpu.memory_space<vmem>>, vector<32x32xf32>
    %168 = vector.broadcast %166 : vector<1x32xf32> to vector<32x32xf32>
    %169 = arith.mulf %167, %168 : vector<32x32xf32>
    %cst_84 = arith.constant dense<0.000000e+00> : vector<32xf32>
    %170 = vector.multi_reduction <add>, %169, %cst_84 [1] : vector<32x32xf32> to vector<32xf32>
    %171 = vector.shape_cast %170 : vector<32xf32> to vector<32x1xf32>
    %172 = vector.broadcast %171 : vector<32x1xf32> to vector<32x32xf32>
    %173 = vector.broadcast %166 : vector<1x32xf32> to vector<32x32xf32>
    %174 = arith.mulf %172, %173 : vector<32x32xf32>
    %175 = arith.subf %167, %174 : vector<32x32xf32>
    %c0_85 = arith.constant 0 : index
    %c0_86 = arith.constant 0 : index
    %176 = vector.load %arg2[%c0_85, %c0_86] : memref<32x32xf32, #tpu.memory_space<vmem>>, vector<32x32xf32>
    tpu.vector_store %arg2[%c0_85, %c0_86], %175 {strides = array<i32>} : memref<32x32xf32, #tpu.memory_space<vmem>>, vector<32x32xf32>,
    %c13_i32 = arith.constant 13 : i32
    %177 = arith.index_cast %c13_i32 : i32 to index
    %c0_87 = arith.constant 0 : index
    %178 = vector.load %arg3[%177, %c0_87] : memref<32x32xf32, #tpu.memory_space<vmem>>, vector<1x32xf32>
    %c0_88 = arith.constant 0 : index
    %c0_89 = arith.constant 0 : index
    %179 = vector.load %arg2[%c0_88, %c0_89] : memref<32x32xf32, #tpu.memory_space<vmem>>, vector<32x32xf32>
    %180 = vector.broadcast %178 : vector<1x32xf32> to vector<32x32xf32>
    %181 = arith.mulf %179, %180 : vector<32x32xf32>
    %cst_90 = arith.constant dense<0.000000e+00> : vector<32xf32>
    %182 = vector.multi_reduction <add>, %181, %cst_90 [1] : vector<32x32xf32> to vector<32xf32>
    %183 = vector.shape_cast %182 : vector<32xf32> to vector<32x1xf32>
    %184 = vector.broadcast %183 : vector<32x1xf32> to vector<32x32xf32>
    %185 = vector.broadcast %178 : vector<1x32xf32> to vector<32x32xf32>
    %186 = arith.mulf %184, %185 : vector<32x32xf32>
    %187 = arith.subf %179, %186 : vector<32x32xf32>
    %c0_91 = arith.constant 0 : index
    %c0_92 = arith.constant 0 : index
    %188 = vector.load %arg2[%c0_91, %c0_92] : memref<32x32xf32, #tpu.memory_space<vmem>>, vector<32x32xf32>
    tpu.vector_store %arg2[%c0_91, %c0_92], %187 {strides = array<i32>} : memref<32x32xf32, #tpu.memory_space<vmem>>, vector<32x32xf32>,
    %c14_i32 = arith.constant 14 : i32
    %189 = arith.index_cast %c14_i32 : i32 to index
    %c0_93 = arith.constant 0 : index
    %190 = vector.load %arg3[%189, %c0_93] : memref<32x32xf32, #tpu.memory_space<vmem>>, vector<1x32xf32>
    %c0_94 = arith.constant 0 : index
    %c0_95 = arith.constant 0 : index
    %191 = vector.load %arg2[%c0_94, %c0_95] : memref<32x32xf32, #tpu.memory_space<vmem>>, vector<32x32xf32>
    %192 = vector.broadcast %190 : vector<1x32xf32> to vector<32x32xf32>
    %193 = arith.mulf %191, %192 : vector<32x32xf32>
    %cst_96 = arith.constant dense<0.000000e+00> : vector<32xf32>
    %194 = vector.multi_reduction <add>, %193, %cst_96 [1] : vector<32x32xf32> to vector<32xf32>
    %195 = vector.shape_cast %194 : vector<32xf32> to vector<32x1xf32>
    %196 = vector.broadcast %195 : vector<32x1xf32> to vector<32x32xf32>
    %197 = vector.broadcast %190 : vector<1x32xf32> to vector<32x32xf32>
    %198 = arith.mulf %196, %197 : vector<32x32xf32>
    %199 = arith.subf %191, %198 : vector<32x32xf32>
    %c0_97 = arith.constant 0 : index
    %c0_98 = arith.constant 0 : index
    %200 = vector.load %arg2[%c0_97, %c0_98] : memref<32x32xf32, #tpu.memory_space<vmem>>, vector<32x32xf32>
    tpu.vector_store %arg2[%c0_97, %c0_98], %199 {strides = array<i32>} : memref<32x32xf32, #tpu.memory_space<vmem>>, vector<32x32xf32>,
    %c15_i32 = arith.constant 15 : i32
    %201 = arith.index_cast %c15_i32 : i32 to index
    %c0_99 = arith.constant 0 : index
    %202 = vector.load %arg3[%201, %c0_99] : memref<32x32xf32, #tpu.memory_space<vmem>>, vector<1x32xf32>
    %c0_100 = arith.constant 0 : index
    %c0_101 = arith.constant 0 : index
    %203 = vector.load %arg2[%c0_100, %c0_101] : memref<32x32xf32, #tpu.memory_space<vmem>>, vector<32x32xf32>
    %204 = vector.broadcast %202 : vector<1x32xf32> to vector<32x32xf32>
    %205 = arith.mulf %203, %204 : vector<32x32xf32>
    %cst_102 = arith.constant dense<0.000000e+00> : vector<32xf32>
    %206 = vector.multi_reduction <add>, %205, %cst_102 [1] : vector<32x32xf32> to vector<32xf32>
    %207 = vector.shape_cast %206 : vector<32xf32> to vector<32x1xf32>
    %208 = vector.broadcast %207 : vector<32x1xf32> to vector<32x32xf32>
    %209 = vector.broadcast %202 : vector<1x32xf32> to vector<32x32xf32>
    %210 = arith.mulf %208, %209 : vector<32x32xf32>
    %211 = arith.subf %203, %210 : vector<32x32xf32>
    %c0_103 = arith.constant 0 : index
    %c0_104 = arith.constant 0 : index
    %212 = vector.load %arg2[%c0_103, %c0_104] : memref<32x32xf32, #tpu.memory_space<vmem>>, vector<32x32xf32>
    tpu.vector_store %arg2[%c0_103, %c0_104], %211 {strides = array<i32>} : memref<32x32xf32, #tpu.memory_space<vmem>>, vector<32x32xf32>,
    %c16_i32 = arith.constant 16 : i32
    %213 = arith.index_cast %c16_i32 : i32 to index
    %c0_105 = arith.constant 0 : index
    %214 = vector.load %arg3[%213, %c0_105] : memref<32x32xf32, #tpu.memory_space<vmem>>, vector<1x32xf32>
    %c0_106 = arith.constant 0 : index
    %c0_107 = arith.constant 0 : index
    %215 = vector.load %arg2[%c0_106, %c0_107] : memref<32x32xf32, #tpu.memory_space<vmem>>, vector<32x32xf32>
    %216 = vector.broadcast %214 : vector<1x32xf32> to vector<32x32xf32>
    %217 = arith.mulf %215, %216 : vector<32x32xf32>
    %cst_108 = arith.constant dense<0.000000e+00> : vector<32xf32>
    %218 = vector.multi_reduction <add>, %217, %cst_108 [1] : vector<32x32xf32> to vector<32xf32>
    %219 = vector.shape_cast %218 : vector<32xf32> to vector<32x1xf32>
    %220 = vector.broadcast %219 : vector<32x1xf32> to vector<32x32xf32>
    %221 = vector.broadcast %214 : vector<1x32xf32> to vector<32x32xf32>
    %222 = arith.mulf %220, %221 : vector<32x32xf32>
    %223 = arith.subf %215, %222 : vector<32x32xf32>
    %c0_109 = arith.constant 0 : index
    %c0_110 = arith.constant 0 : index
    %224 = vector.load %arg2[%c0_109, %c0_110] : memref<32x32xf32, #tpu.memory_space<vmem>>, vector<32x32xf32>
    tpu.vector_store %arg2[%c0_109, %c0_110], %223 {strides = array<i32>} : memref<32x32xf32, #tpu.memory_space<vmem>>, vector<32x32xf32>,
    %c17_i32 = arith.constant 17 : i32
    %225 = arith.index_cast %c17_i32 : i32 to index
    %c0_111 = arith.constant 0 : index
    %226 = vector.load %arg3[%225, %c0_111] : memref<32x32xf32, #tpu.memory_space<vmem>>, vector<1x32xf32>
    %c0_112 = arith.constant 0 : index
    %c0_113 = arith.constant 0 : index
    %227 = vector.load %arg2[%c0_112, %c0_113] : memref<32x32xf32, #tpu.memory_space<vmem>>, vector<32x32xf32>
    %228 = vector.broadcast %226 : vector<1x32xf32> to vector<32x32xf32>
    %229 = arith.mulf %227, %228 : vector<32x32xf32>
    %cst_114 = arith.constant dense<0.000000e+00> : vector<32xf32>
    %230 = vector.multi_reduction <add>, %229, %cst_114 [1] : vector<32x32xf32> to vector<32xf32>
    %231 = vector.shape_cast %230 : vector<32xf32> to vector<32x1xf32>
    %232 = vector.broadcast %231 : vector<32x1xf32> to vector<32x32xf32>
    %233 = vector.broadcast %226 : vector<1x32xf32> to vector<32x32xf32>
    %234 = arith.mulf %232, %233 : vector<32x32xf32>
    %235 = arith.subf %227, %234 : vector<32x32xf32>
    %c0_115 = arith.constant 0 : index
    %c0_116 = arith.constant 0 : index
    %236 = vector.load %arg2[%c0_115, %c0_116] : memref<32x32xf32, #tpu.memory_space<vmem>>, vector<32x32xf32>
    tpu.vector_store %arg2[%c0_115, %c0_116], %235 {strides = array<i32>} : memref<32x32xf32, #tpu.memory_space<vmem>>, vector<32x32xf32>,
    %c18_i32 = arith.constant 18 : i32
    %237 = arith.index_cast %c18_i32 : i32 to index
    %c0_117 = arith.constant 0 : index
    %238 = vector.load %arg3[%237, %c0_117] : memref<32x32xf32, #tpu.memory_space<vmem>>, vector<1x32xf32>
    %c0_118 = arith.constant 0 : index
    %c0_119 = arith.constant 0 : index
    %239 = vector.load %arg2[%c0_118, %c0_119] : memref<32x32xf32, #tpu.memory_space<vmem>>, vector<32x32xf32>
    %240 = vector.broadcast %238 : vector<1x32xf32> to vector<32x32xf32>
    %241 = arith.mulf %239, %240 : vector<32x32xf32>
    %cst_120 = arith.constant dense<0.000000e+00> : vector<32xf32>
    %242 = vector.multi_reduction <add>, %241, %cst_120 [1] : vector<32x32xf32> to vector<32xf32>
    %243 = vector.shape_cast %242 : vector<32xf32> to vector<32x1xf32>
    %244 = vector.broadcast %243 : vector<32x1xf32> to vector<32x32xf32>
    %245 = vector.broadcast %238 : vector<1x32xf32> to vector<32x32xf32>
    %246 = arith.mulf %244, %245 : vector<32x32xf32>
    %247 = arith.subf %239, %246 : vector<32x32xf32>
    %c0_121 = arith.constant 0 : index
    %c0_122 = arith.constant 0 : index
    %248 = vector.load %arg2[%c0_121, %c0_122] : memref<32x32xf32, #tpu.memory_space<vmem>>, vector<32x32xf32>
    tpu.vector_store %arg2[%c0_121, %c0_122], %247 {strides = array<i32>} : memref<32x32xf32, #tpu.memory_space<vmem>>, vector<32x32xf32>,
    %c19_i32 = arith.constant 19 : i32
    %249 = arith.index_cast %c19_i32 : i32 to index
    %c0_123 = arith.constant 0 : index
    %250 = vector.load %arg3[%249, %c0_123] : memref<32x32xf32, #tpu.memory_space<vmem>>, vector<1x32xf32>
    %c0_124 = arith.constant 0 : index
    %c0_125 = arith.constant 0 : index
    %251 = vector.load %arg2[%c0_124, %c0_125] : memref<32x32xf32, #tpu.memory_space<vmem>>, vector<32x32xf32>
    %252 = vector.broadcast %250 : vector<1x32xf32> to vector<32x32xf32>
    %253 = arith.mulf %251, %252 : vector<32x32xf32>
    %cst_126 = arith.constant dense<0.000000e+00> : vector<32xf32>
    %254 = vector.multi_reduction <add>, %253, %cst_126 [1] : vector<32x32xf32> to vector<32xf32>
    %255 = vector.shape_cast %254 : vector<32xf32> to vector<32x1xf32>
    %256 = vector.broadcast %255 : vector<32x1xf32> to vector<32x32xf32>
    %257 = vector.broadcast %250 : vector<1x32xf32> to vector<32x32xf32>
    %258 = arith.mulf %256, %257 : vector<32x32xf32>
    %259 = arith.subf %251, %258 : vector<32x32xf32>
    %c0_127 = arith.constant 0 : index
    %c0_128 = arith.constant 0 : index
    %260 = vector.load %arg2[%c0_127, %c0_128] : memref<32x32xf32, #tpu.memory_space<vmem>>, vector<32x32xf32>
    tpu.vector_store %arg2[%c0_127, %c0_128], %259 {strides = array<i32>} : memref<32x32xf32, #tpu.memory_space<vmem>>, vector<32x32xf32>,
    %c20_i32 = arith.constant 20 : i32
    %261 = arith.index_cast %c20_i32 : i32 to index
    %c0_129 = arith.constant 0 : index
    %262 = vector.load %arg3[%261, %c0_129] : memref<32x32xf32, #tpu.memory_space<vmem>>, vector<1x32xf32>
    %c0_130 = arith.constant 0 : index
    %c0_131 = arith.constant 0 : index
    %263 = vector.load %arg2[%c0_130, %c0_131] : memref<32x32xf32, #tpu.memory_space<vmem>>, vector<32x32xf32>
    %264 = vector.broadcast %262 : vector<1x32xf32> to vector<32x32xf32>
    %265 = arith.mulf %263, %264 : vector<32x32xf32>
    %cst_132 = arith.constant dense<0.000000e+00> : vector<32xf32>
    %266 = vector.multi_reduction <add>, %265, %cst_132 [1] : vector<32x32xf32> to vector<32xf32>
    %267 = vector.shape_cast %266 : vector<32xf32> to vector<32x1xf32>
    %268 = vector.broadcast %267 : vector<32x1xf32> to vector<32x32xf32>
    %269 = vector.broadcast %262 : vector<1x32xf32> to vector<32x32xf32>
    %270 = arith.mulf %268, %269 : vector<32x32xf32>
    %271 = arith.subf %263, %270 : vector<32x32xf32>
    %c0_133 = arith.constant 0 : index
    %c0_134 = arith.constant 0 : index
    %272 = vector.load %arg2[%c0_133, %c0_134] : memref<32x32xf32, #tpu.memory_space<vmem>>, vector<32x32xf32>
    tpu.vector_store %arg2[%c0_133, %c0_134], %271 {strides = array<i32>} : memref<32x32xf32, #tpu.memory_space<vmem>>, vector<32x32xf32>,
    %c21_i32 = arith.constant 21 : i32
    %273 = arith.index_cast %c21_i32 : i32 to index
    %c0_135 = arith.constant 0 : index
    %274 = vector.load %arg3[%273, %c0_135] : memref<32x32xf32, #tpu.memory_space<vmem>>, vector<1x32xf32>
    %c0_136 = arith.constant 0 : index
    %c0_137 = arith.constant 0 : index
    %275 = vector.load %arg2[%c0_136, %c0_137] : memref<32x32xf32, #tpu.memory_space<vmem>>, vector<32x32xf32>
    %276 = vector.broadcast %274 : vector<1x32xf32> to vector<32x32xf32>
    %277 = arith.mulf %275, %276 : vector<32x32xf32>
    %cst_138 = arith.constant dense<0.000000e+00> : vector<32xf32>
    %278 = vector.multi_reduction <add>, %277, %cst_138 [1] : vector<32x32xf32> to vector<32xf32>
    %279 = vector.shape_cast %278 : vector<32xf32> to vector<32x1xf32>
    %280 = vector.broadcast %279 : vector<32x1xf32> to vector<32x32xf32>
    %281 = vector.broadcast %274 : vector<1x32xf32> to vector<32x32xf32>
    %282 = arith.mulf %280, %281 : vector<32x32xf32>
    %283 = arith.subf %275, %282 : vector<32x32xf32>
    %c0_139 = arith.constant 0 : index
    %c0_140 = arith.constant 0 : index
    %284 = vector.load %arg2[%c0_139, %c0_140] : memref<32x32xf32, #tpu.memory_space<vmem>>, vector<32x32xf32>
    tpu.vector_store %arg2[%c0_139, %c0_140], %283 {strides = array<i32>} : memref<32x32xf32, #tpu.memory_space<vmem>>, vector<32x32xf32>,
    %c22_i32 = arith.constant 22 : i32
    %285 = arith.index_cast %c22_i32 : i32 to index
    %c0_141 = arith.constant 0 : index
    %286 = vector.load %arg3[%285, %c0_141] : memref<32x32xf32, #tpu.memory_space<vmem>>, vector<1x32xf32>
    %c0_142 = arith.constant 0 : index
    %c0_143 = arith.constant 0 : index
    %287 = vector.load %arg2[%c0_142, %c0_143] : memref<32x32xf32, #tpu.memory_space<vmem>>, vector<32x32xf32>
    %288 = vector.broadcast %286 : vector<1x32xf32> to vector<32x32xf32>
    %289 = arith.mulf %287, %288 : vector<32x32xf32>
    %cst_144 = arith.constant dense<0.000000e+00> : vector<32xf32>
    %290 = vector.multi_reduction <add>, %289, %cst_144 [1] : vector<32x32xf32> to vector<32xf32>
    %291 = vector.shape_cast %290 : vector<32xf32> to vector<32x1xf32>
    %292 = vector.broadcast %291 : vector<32x1xf32> to vector<32x32xf32>
    %293 = vector.broadcast %286 : vector<1x32xf32> to vector<32x32xf32>
    %294 = arith.mulf %292, %293 : vector<32x32xf32>
    %295 = arith.subf %287, %294 : vector<32x32xf32>
    %c0_145 = arith.constant 0 : index
    %c0_146 = arith.constant 0 : index
    %296 = vector.load %arg2[%c0_145, %c0_146] : memref<32x32xf32, #tpu.memory_space<vmem>>, vector<32x32xf32>
    tpu.vector_store %arg2[%c0_145, %c0_146], %295 {strides = array<i32>} : memref<32x32xf32, #tpu.memory_space<vmem>>, vector<32x32xf32>,
    %c23_i32 = arith.constant 23 : i32
    %297 = arith.index_cast %c23_i32 : i32 to index
    %c0_147 = arith.constant 0 : index
    %298 = vector.load %arg3[%297, %c0_147] : memref<32x32xf32, #tpu.memory_space<vmem>>, vector<1x32xf32>
    %c0_148 = arith.constant 0 : index
    %c0_149 = arith.constant 0 : index
    %299 = vector.load %arg2[%c0_148, %c0_149] : memref<32x32xf32, #tpu.memory_space<vmem>>, vector<32x32xf32>
    %300 = vector.broadcast %298 : vector<1x32xf32> to vector<32x32xf32>
    %301 = arith.mulf %299, %300 : vector<32x32xf32>
    %cst_150 = arith.constant dense<0.000000e+00> : vector<32xf32>
    %302 = vector.multi_reduction <add>, %301, %cst_150 [1] : vector<32x32xf32> to vector<32xf32>
    %303 = vector.shape_cast %302 : vector<32xf32> to vector<32x1xf32>
    %304 = vector.broadcast %303 : vector<32x1xf32> to vector<32x32xf32>
    %305 = vector.broadcast %298 : vector<1x32xf32> to vector<32x32xf32>
    %306 = arith.mulf %304, %305 : vector<32x32xf32>
    %307 = arith.subf %299, %306 : vector<32x32xf32>
    %c0_151 = arith.constant 0 : index
    %c0_152 = arith.constant 0 : index
    %308 = vector.load %arg2[%c0_151, %c0_152] : memref<32x32xf32, #tpu.memory_space<vmem>>, vector<32x32xf32>
    tpu.vector_store %arg2[%c0_151, %c0_152], %307 {strides = array<i32>} : memref<32x32xf32, #tpu.memory_space<vmem>>, vector<32x32xf32>,
    %c24_i32 = arith.constant 24 : i32
    %309 = arith.index_cast %c24_i32 : i32 to index
    %c0_153 = arith.constant 0 : index
    %310 = vector.load %arg3[%309, %c0_153] : memref<32x32xf32, #tpu.memory_space<vmem>>, vector<1x32xf32>
    %c0_154 = arith.constant 0 : index
    %c0_155 = arith.constant 0 : index
    %311 = vector.load %arg2[%c0_154, %c0_155] : memref<32x32xf32, #tpu.memory_space<vmem>>, vector<32x32xf32>
    %312 = vector.broadcast %310 : vector<1x32xf32> to vector<32x32xf32>
    %313 = arith.mulf %311, %312 : vector<32x32xf32>
    %cst_156 = arith.constant dense<0.000000e+00> : vector<32xf32>
    %314 = vector.multi_reduction <add>, %313, %cst_156 [1] : vector<32x32xf32> to vector<32xf32>
    %315 = vector.shape_cast %314 : vector<32xf32> to vector<32x1xf32>
    %316 = vector.broadcast %315 : vector<32x1xf32> to vector<32x32xf32>
    %317 = vector.broadcast %310 : vector<1x32xf32> to vector<32x32xf32>
    %318 = arith.mulf %316, %317 : vector<32x32xf32>
    %319 = arith.subf %311, %318 : vector<32x32xf32>
    %c0_157 = arith.constant 0 : index
    %c0_158 = arith.constant 0 : index
    %320 = vector.load %arg2[%c0_157, %c0_158] : memref<32x32xf32, #tpu.memory_space<vmem>>, vector<32x32xf32>
    tpu.vector_store %arg2[%c0_157, %c0_158], %319 {strides = array<i32>} : memref<32x32xf32, #tpu.memory_space<vmem>>, vector<32x32xf32>,
    %c25_i32 = arith.constant 25 : i32
    %321 = arith.index_cast %c25_i32 : i32 to index
    %c0_159 = arith.constant 0 : index
    %322 = vector.load %arg3[%321, %c0_159] : memref<32x32xf32, #tpu.memory_space<vmem>>, vector<1x32xf32>
    %c0_160 = arith.constant 0 : index
    %c0_161 = arith.constant 0 : index
    %323 = vector.load %arg2[%c0_160, %c0_161] : memref<32x32xf32, #tpu.memory_space<vmem>>, vector<32x32xf32>
    %324 = vector.broadcast %322 : vector<1x32xf32> to vector<32x32xf32>
    %325 = arith.mulf %323, %324 : vector<32x32xf32>
    %cst_162 = arith.constant dense<0.000000e+00> : vector<32xf32>
    %326 = vector.multi_reduction <add>, %325, %cst_162 [1] : vector<32x32xf32> to vector<32xf32>
    %327 = vector.shape_cast %326 : vector<32xf32> to vector<32x1xf32>
    %328 = vector.broadcast %327 : vector<32x1xf32> to vector<32x32xf32>
    %329 = vector.broadcast %322 : vector<1x32xf32> to vector<32x32xf32>
    %330 = arith.mulf %328, %329 : vector<32x32xf32>
    %331 = arith.subf %323, %330 : vector<32x32xf32>
    %c0_163 = arith.constant 0 : index
    %c0_164 = arith.constant 0 : index
    %332 = vector.load %arg2[%c0_163, %c0_164] : memref<32x32xf32, #tpu.memory_space<vmem>>, vector<32x32xf32>
    tpu.vector_store %arg2[%c0_163, %c0_164], %331 {strides = array<i32>} : memref<32x32xf32, #tpu.memory_space<vmem>>, vector<32x32xf32>,
    %c26_i32 = arith.constant 26 : i32
    %333 = arith.index_cast %c26_i32 : i32 to index
    %c0_165 = arith.constant 0 : index
    %334 = vector.load %arg3[%333, %c0_165] : memref<32x32xf32, #tpu.memory_space<vmem>>, vector<1x32xf32>
    %c0_166 = arith.constant 0 : index
    %c0_167 = arith.constant 0 : index
    %335 = vector.load %arg2[%c0_166, %c0_167] : memref<32x32xf32, #tpu.memory_space<vmem>>, vector<32x32xf32>
    %336 = vector.broadcast %334 : vector<1x32xf32> to vector<32x32xf32>
    %337 = arith.mulf %335, %336 : vector<32x32xf32>
    %cst_168 = arith.constant dense<0.000000e+00> : vector<32xf32>
    %338 = vector.multi_reduction <add>, %337, %cst_168 [1] : vector<32x32xf32> to vector<32xf32>
    %339 = vector.shape_cast %338 : vector<32xf32> to vector<32x1xf32>
    %340 = vector.broadcast %339 : vector<32x1xf32> to vector<32x32xf32>
    %341 = vector.broadcast %334 : vector<1x32xf32> to vector<32x32xf32>
    %342 = arith.mulf %340, %341 : vector<32x32xf32>
    %343 = arith.subf %335, %342 : vector<32x32xf32>
    %c0_169 = arith.constant 0 : index
    %c0_170 = arith.constant 0 : index
    %344 = vector.load %arg2[%c0_169, %c0_170] : memref<32x32xf32, #tpu.memory_space<vmem>>, vector<32x32xf32>
    tpu.vector_store %arg2[%c0_169, %c0_170], %343 {strides = array<i32>} : memref<32x32xf32, #tpu.memory_space<vmem>>, vector<32x32xf32>,
    %c27_i32 = arith.constant 27 : i32
    %345 = arith.index_cast %c27_i32 : i32 to index
    %c0_171 = arith.constant 0 : index
    %346 = vector.load %arg3[%345, %c0_171] : memref<32x32xf32, #tpu.memory_space<vmem>>, vector<1x32xf32>
    %c0_172 = arith.constant 0 : index
    %c0_173 = arith.constant 0 : index
    %347 = vector.load %arg2[%c0_172, %c0_173] : memref<32x32xf32, #tpu.memory_space<vmem>>, vector<32x32xf32>
    %348 = vector.broadcast %346 : vector<1x32xf32> to vector<32x32xf32>
    %349 = arith.mulf %347, %348 : vector<32x32xf32>
    %cst_174 = arith.constant dense<0.000000e+00> : vector<32xf32>
    %350 = vector.multi_reduction <add>, %349, %cst_174 [1] : vector<32x32xf32> to vector<32xf32>
    %351 = vector.shape_cast %350 : vector<32xf32> to vector<32x1xf32>
    %352 = vector.broadcast %351 : vector<32x1xf32> to vector<32x32xf32>
    %353 = vector.broadcast %346 : vector<1x32xf32> to vector<32x32xf32>
    %354 = arith.mulf %352, %353 : vector<32x32xf32>
    %355 = arith.subf %347, %354 : vector<32x32xf32>
    %c0_175 = arith.constant 0 : index
    %c0_176 = arith.constant 0 : index
    %356 = vector.load %arg2[%c0_175, %c0_176] : memref<32x32xf32, #tpu.memory_space<vmem>>, vector<32x32xf32>
    tpu.vector_store %arg2[%c0_175, %c0_176], %355 {strides = array<i32>} : memref<32x32xf32, #tpu.memory_space<vmem>>, vector<32x32xf32>,
    %c28_i32 = arith.constant 28 : i32
    %357 = arith.index_cast %c28_i32 : i32 to index
    %c0_177 = arith.constant 0 : index
    %358 = vector.load %arg3[%357, %c0_177] : memref<32x32xf32, #tpu.memory_space<vmem>>, vector<1x32xf32>
    %c0_178 = arith.constant 0 : index
    %c0_179 = arith.constant 0 : index
    %359 = vector.load %arg2[%c0_178, %c0_179] : memref<32x32xf32, #tpu.memory_space<vmem>>, vector<32x32xf32>
    %360 = vector.broadcast %358 : vector<1x32xf32> to vector<32x32xf32>
    %361 = arith.mulf %359, %360 : vector<32x32xf32>
    %cst_180 = arith.constant dense<0.000000e+00> : vector<32xf32>
    %362 = vector.multi_reduction <add>, %361, %cst_180 [1] : vector<32x32xf32> to vector<32xf32>
    %363 = vector.shape_cast %362 : vector<32xf32> to vector<32x1xf32>
    %364 = vector.broadcast %363 : vector<32x1xf32> to vector<32x32xf32>
    %365 = vector.broadcast %358 : vector<1x32xf32> to vector<32x32xf32>
    %366 = arith.mulf %364, %365 : vector<32x32xf32>
    %367 = arith.subf %359, %366 : vector<32x32xf32>
    %c0_181 = arith.constant 0 : index
    %c0_182 = arith.constant 0 : index
    %368 = vector.load %arg2[%c0_181, %c0_182] : memref<32x32xf32, #tpu.memory_space<vmem>>, vector<32x32xf32>
    tpu.vector_store %arg2[%c0_181, %c0_182], %367 {strides = array<i32>} : memref<32x32xf32, #tpu.memory_space<vmem>>, vector<32x32xf32>,
    %c29_i32 = arith.constant 29 : i32
    %369 = arith.index_cast %c29_i32 : i32 to index
    %c0_183 = arith.constant 0 : index
    %370 = vector.load %arg3[%369, %c0_183] : memref<32x32xf32, #tpu.memory_space<vmem>>, vector<1x32xf32>
    %c0_184 = arith.constant 0 : index
    %c0_185 = arith.constant 0 : index
    %371 = vector.load %arg2[%c0_184, %c0_185] : memref<32x32xf32, #tpu.memory_space<vmem>>, vector<32x32xf32>
    %372 = vector.broadcast %370 : vector<1x32xf32> to vector<32x32xf32>
    %373 = arith.mulf %371, %372 : vector<32x32xf32>
    %cst_186 = arith.constant dense<0.000000e+00> : vector<32xf32>
    %374 = vector.multi_reduction <add>, %373, %cst_186 [1] : vector<32x32xf32> to vector<32xf32>
    %375 = vector.shape_cast %374 : vector<32xf32> to vector<32x1xf32>
    %376 = vector.broadcast %375 : vector<32x1xf32> to vector<32x32xf32>
    %377 = vector.broadcast %370 : vector<1x32xf32> to vector<32x32xf32>
    %378 = arith.mulf %376, %377 : vector<32x32xf32>
    %379 = arith.subf %371, %378 : vector<32x32xf32>
    %c0_187 = arith.constant 0 : index
    %c0_188 = arith.constant 0 : index
    %380 = vector.load %arg2[%c0_187, %c0_188] : memref<32x32xf32, #tpu.memory_space<vmem>>, vector<32x32xf32>
    tpu.vector_store %arg2[%c0_187, %c0_188], %379 {strides = array<i32>} : memref<32x32xf32, #tpu.memory_space<vmem>>, vector<32x32xf32>,
    %c30_i32 = arith.constant 30 : i32
    %381 = arith.index_cast %c30_i32 : i32 to index
    %c0_189 = arith.constant 0 : index
    %382 = vector.load %arg3[%381, %c0_189] : memref<32x32xf32, #tpu.memory_space<vmem>>, vector<1x32xf32>
    %c0_190 = arith.constant 0 : index
    %c0_191 = arith.constant 0 : index
    %383 = vector.load %arg2[%c0_190, %c0_191] : memref<32x32xf32, #tpu.memory_space<vmem>>, vector<32x32xf32>
    %384 = vector.broadcast %382 : vector<1x32xf32> to vector<32x32xf32>
    %385 = arith.mulf %383, %384 : vector<32x32xf32>
    %cst_192 = arith.constant dense<0.000000e+00> : vector<32xf32>
    %386 = vector.multi_reduction <add>, %385, %cst_192 [1] : vector<32x32xf32> to vector<32xf32>
    %387 = vector.shape_cast %386 : vector<32xf32> to vector<32x1xf32>
    %388 = vector.broadcast %387 : vector<32x1xf32> to vector<32x32xf32>
    %389 = vector.broadcast %382 : vector<1x32xf32> to vector<32x32xf32>
    %390 = arith.mulf %388, %389 : vector<32x32xf32>
    %391 = arith.subf %383, %390 : vector<32x32xf32>
    %c0_193 = arith.constant 0 : index
    %c0_194 = arith.constant 0 : index
    %392 = vector.load %arg2[%c0_193, %c0_194] : memref<32x32xf32, #tpu.memory_space<vmem>>, vector<32x32xf32>
    tpu.vector_store %arg2[%c0_193, %c0_194], %391 {strides = array<i32>} : memref<32x32xf32, #tpu.memory_space<vmem>>, vector<32x32xf32>,
    %c31_i32 = arith.constant 31 : i32
    %393 = arith.index_cast %c31_i32 : i32 to index
    %c0_195 = arith.constant 0 : index
    %394 = vector.load %arg3[%393, %c0_195] : memref<32x32xf32, #tpu.memory_space<vmem>>, vector<1x32xf32>
    %c0_196 = arith.constant 0 : index
    %c0_197 = arith.constant 0 : index
    %395 = vector.load %arg2[%c0_196, %c0_197] : memref<32x32xf32, #tpu.memory_space<vmem>>, vector<32x32xf32>
    %396 = vector.broadcast %394 : vector<1x32xf32> to vector<32x32xf32>
    %397 = arith.mulf %395, %396 : vector<32x32xf32>
    %cst_198 = arith.constant dense<0.000000e+00> : vector<32xf32>
    %398 = vector.multi_reduction <add>, %397, %cst_198 [1] : vector<32x32xf32> to vector<32xf32>
    %399 = vector.shape_cast %398 : vector<32xf32> to vector<32x1xf32>
    %400 = vector.broadcast %399 : vector<32x1xf32> to vector<32x32xf32>
    %401 = vector.broadcast %394 : vector<1x32xf32> to vector<32x32xf32>
    %402 = arith.mulf %400, %401 : vector<32x32xf32>
    %403 = arith.subf %395, %402 : vector<32x32xf32>
    %c0_199 = arith.constant 0 : index
    %c0_200 = arith.constant 0 : index
    %404 = vector.load %arg2[%c0_199, %c0_200] : memref<32x32xf32, #tpu.memory_space<vmem>>, vector<32x32xf32>
    tpu.vector_store %arg2[%c0_199, %c0_200], %403 {strides = array<i32>} : memref<32x32xf32, #tpu.memory_space<vmem>>, vector<32x32xf32>,
    %c32_i32 = arith.constant 32 : i32
    return
  }
  func.func @transform_0(%arg0: i32) -> (i32, i32, i32) {
    %c0_i32 = arith.constant 0 : i32
    %c0_i32_0 = arith.constant 0 : i32
    %c0_i32_1 = arith.constant 0 : i32
    %c0_i32_2 = arith.constant 0 : i32
    return %c0_i32, %c0_i32_0, %c0_i32_1 : i32, i32, i32
  }
  func.func @transform_1(%arg0: i32) -> (i32, i32) {
    %c0_i32 = arith.constant 0 : i32
    %c0_i32_0 = arith.constant 0 : i32
    %c0_i32_1 = arith.constant 0 : i32
    return %c0_i32, %c0_i32_0 : i32, i32
  }
}

</mosaic_0001>

<llo_original>
// kernel: tpu_custom_call.1
$region0: #{tpu_custom_call.1}
  #allocation0 [shape = 'u32[]', space=smem, size = 0x4, offset = 0x4, fixed_abs, tag = 'smem constant byte address 0x4 - core index']
  #allocation1 [shape = 'u32[72,128]{1,0:T(1,128)}', space=vmem, size = 0x9000, scoped, tag = 'internal scratch']
  #allocation2 [shape = 'f32[32,32]{1,0:T(8,128)}', space=vmem, size = 0x4000, scoped, tag = 'scratch operand']
  %s0 = inlined_call_operand.hbm [shape: f32[1,32,32], index: 0, kind: input, shape index: {}]
  %s1 = inlined_call_operand.hbm [shape: f32[32,32], index: 1, kind: output, shape index: {}]
  %s2 = sld [smem:[#allocation0]]
  $region18: #{tpu_custom_call.1} parent=0
    _
  %s4 = ssub.s32 1, %s2
  %s5 = scalar_select 0, %s4, %s2
  $region1: #{tpu_custom_call.1} parent=0
    #allocation3 [shape = 'u8[16384]{0}', space=vmem, size = 0x4000, scoped, tag = 'input window, operand 0, single buffered']
    #allocation4 [shape = 's32[1]{0}', space=sflag, size = 0x4, scoped, tag = 'scoped memory for tpu_custom_call.1']
    #allocation5 [shape = 's32[1]{0}', space=sflag, size = 0x4, scoped, tag = 'scoped memory for tpu_custom_call.1']
    #allocation6 [shape = 'u8[16384]{0}', space=vmem, size = 0x4000, scoped, tag = 'output window, operand 0, single buffered']
    %6 = vsyncpa [#allocation4], 0
    %7 = vsyncpa [#allocation5], 0
    // Predicated region
    $region2: #{tpu_custom_call.1} parent=1 // pred_check
      _
    $region3: #{tpu_custom_call.1} parent=1 // pred_check_branch
      %9 = sbr.rel (0) target = $region5
    $region4: #{tpu_custom_call.1} parent=1 // pred_region
      %11 = vsyncadd [#allocation4], 0
      %s12 = sshll.u32 %s0, 4
      %s13 = int_to_ptr.hbm [resolvable:$true] %s12
      %s14 = sshll.u32 [#allocation3], 4
      %s15 = int_to_ptr.vmem [resolvable:$true] %s14
      %20 = dma.hbm_to_vmem [thread:$0]  %s13, 512, %s15, [#allocation4], 128, 128, 8
    $region5: #{tpu_custom_call.1} parent=1 // pred_fallthru
      _
    // Predicated region
    $region6: #{tpu_custom_call.1} parent=1 // pred_check
      _
    $region7: #{tpu_custom_call.1} parent=1 // pred_check_branch
      %22 = sbr.rel (0) target = $region9
    $region8: #{tpu_custom_call.1} parent=1 // pred_region
      %24 = dma.done [#allocation4], 512
    $region9: #{tpu_custom_call.1} parent=1 // pred_fallthru
      _
    %v25 = vld [vmem:[#allocation3] sm:$0xff]
    %v26 = vld [vmem:[#allocation3 + $0x8] sm:$0xff]
    %v27 = vld [vmem:[#allocation3 + $0x10] sm:$0xff]
    %v28 = vld [vmem:[#allocation3 + $0x18] sm:$0xff]
    %v29 = vmul.f32 %v25, %v25
    %v30 = vmul.f32 %v26, %v26
    %v31 = vmul.f32 %v27, %v27
    %v32 = vmul.f32 %v28, %v28
    %vm33 = vcmask 261120
    %v34 = vsel %vm33, %v29, 0.0
    %35 = vadd.xlane.f32.xlu0 %v34
    %v36 = vpop.xlane.xlu0 %35
    %v37 = vsel %vm33, %v30, 0.0
    %38 = vadd.xlane.f32.xlu0 %v37
    %v39 = vpop.xlane.xlu0 %38
    %v40 = vsel %vm33, %v31, 0.0
    %41 = vadd.xlane.f32.xlu0 %v40
    %v42 = vpop.xlane.xlu0 %41
    %v43 = vsel %vm33, %v32, 0.0
    %44 = vadd.xlane.f32.xlu0 %v43
    %v45 = vpop.xlane.xlu0 %44
    %v46 = vrsqrt.pop %v36
    %v47 = vmul.f32 %v46, %v36
    %v48 = vmul.f32 %v47, %v46
    %v49 = vmul.f32 0.5, %v48
    %v50 = vsub.f32 1.5, %v49
    %v51 = vmul.f32 %v46, %v50
    %v52 = vmul.f32 %v36, %v51
    %vm53 = vcmp.eq.f32.partialorder %v36, inf
    %v54 = vsel %vm53, %v36, %v52
    %vm55 = vcmp.eq.f32.partialorder %v36, 0.0
    %v56 = vand.u32 %v36, 2147483648
    %v57 = vsel %vm55, %v56, %v54
    %v58 = vrsqrt.pop %v39
    %v59 = vmul.f32 %v58, %v39
    %v60 = vmul.f32 %v59, %v58
    %v61 = vmul.f32 0.5, %v60
    %v62 = vsub.f32 1.5, %v61
    %v63 = vmul.f32 %v58, %v62
    %v64 = vmul.f32 %v39, %v63
    %vm65 = vcmp.eq.f32.partialorder %v39, inf
    %v66 = vsel %vm65, %v39, %v64
    %vm67 = vcmp.eq.f32.partialorder %v39, 0.0
    %v68 = vand.u32 %v39, 2147483648
    %v69 = vsel %vm67, %v68, %v66
    %v70 = vrsqrt.pop %v42
    %v71 = vmul.f32 %v70, %v42
    %v72 = vmul.f32 %v71, %v70
    %v73 = vmul.f32 0.5, %v72
    %v74 = vsub.f32 1.5, %v73
    %v75 = vmul.f32 %v70, %v74
    %v76 = vmul.f32 %v42, %v75
    %vm77 = vcmp.eq.f32.partialorder %v42, inf
    %v78 = vsel %vm77, %v42, %v76
    %vm79 = vcmp.eq.f32.partialorder %v42, 0.0
    %v80 = vand.u32 %v42, 2147483648
    %v81 = vsel %vm79, %v80, %v78
    %v82 = vrsqrt.pop %v45
    %v83 = vmul.f32 %v82, %v45
    %v84 = vmul.f32 %v83, %v82
    %v85 = vmul.f32 0.5, %v84
    %v86 = vsub.f32 1.5, %v85
    %v87 = vmul.f32 %v82, %v86
    %v88 = vmul.f32 %v45, %v87
    %vm89 = vcmp.eq.f32.partialorder %v45, inf
    %v90 = vsel %vm89, %v45, %v88
    %vm91 = vcmp.eq.f32.partialorder %v45, 0.0
    %v92 = vand.u32 %v45, 2147483648
    %v93 = vsel %vm91, %v92, %v90
    %v94 = vadd.f32 %v57, 1e-06
    %v95 = vadd.f32 %v69, 1e-06
    %v96 = vadd.f32 %v81, 1e-06
    %v97 = vadd.f32 %v93, 1e-06
    %v98 = vrcp.pop %v94
    %v99 = vmul.f32 %v94, %v98
    %v100 = vsub.f32 1.0, %v99
    %v101 = vmul.f32 %v98, %v100
    %v102 = vadd.f32 %v98, %v101
    %vm103 = vweird.f32 %v94
    %vm104 = vweird.f32 %v98
    %vm105 = vmor %vm103, %vm104
    %v106 = vsel %vm105, %v98, %v102
    %v107 = vand.u32 2147483647, %v94
    %vm108 = vcmp.eq.f32.partialorder %v107, 8.507059e+37
    %v109 = vand.u32 %v94, 2147483648
    %v110 = vor.u32 1.1754944e-38, %v109
    %v111 = vsel %vm108, %v110, %v106
    %v112 = vmul.f32 1.0, %v111
    %v113 = vrcp.pop %v95
    %v114 = vmul.f32 %v95, %v113
    %v115 = vsub.f32 1.0, %v114
    %v116 = vmul.f32 %v113, %v115
    %v117 = vadd.f32 %v113, %v116
    %vm118 = vweird.f32 %v95
    %vm119 = vweird.f32 %v113
    %vm120 = vmor %vm118, %vm119
    %v121 = vsel %vm120, %v113, %v117
    %v122 = vand.u32 2147483647, %v95
    %vm123 = vcmp.eq.f32.partialorder %v122, 8.507059e+37
    %v124 = vand.u32 %v95, 2147483648
    %v125 = vor.u32 1.1754944e-38, %v124
    %v126 = vsel %vm123, %v125, %v121
    %v127 = vmul.f32 1.0, %v126
    %v128 = vrcp.pop %v96
    %v129 = vmul.f32 %v96, %v128
    %v130 = vsub.f32 1.0, %v129
    %v131 = vmul.f32 %v128, %v130
    %v132 = vadd.f32 %v128, %v131
    %vm133 = vweird.f32 %v96
    %vm134 = vweird.f32 %v128
    %vm135 = vmor %vm133, %vm134
    %v136 = vsel %vm135, %v128, %v132
    %v137 = vand.u32 2147483647, %v96
    %vm138 = vcmp.eq.f32.partialorder %v137, 8.507059e+37
    %v139 = vand.u32 %v96, 2147483648
    %v140 = vor.u32 1.1754944e-38, %v139
    %v141 = vsel %vm138, %v140, %v136
    %v142 = vmul.f32 1.0, %v141
    %v143 = vrcp.pop %v97
    %v144 = vmul.f32 %v97, %v143
    %v145 = vsub.f32 1.0, %v144
    %v146 = vmul.f32 %v143, %v145
    %v147 = vadd.f32 %v143, %v146
    %vm148 = vweird.f32 %v97
    %vm149 = vweird.f32 %v143
    %vm150 = vmor %vm148, %vm149
    %v151 = vsel %vm150, %v143, %v147
    %v152 = vand.u32 2147483647, %v97
    %vm153 = vcmp.eq.f32.partialorder %v152, 8.507059e+37
    %v154 = vand.u32 %v97, 2147483648
    %v155 = vor.u32 1.1754944e-38, %v154
    %v156 = vsel %vm153, %v155, %v151
    %v157 = vmul.f32 1.0, %v156
    %v158 = vmul.f32 %v25, %v112
    %v159 = vmul.f32 %v26, %v127
    %v160 = vmul.f32 %v27, %v142
    %v161 = vmul.f32 %v28, %v157
    %v162 = vmul.f32 %v158, 1.4142135
    %v163 = vmul.f32 %v159, 1.4142135
    %v164 = vmul.f32 %v160, 1.4142135
    %v165 = vmul.f32 %v161, 1.4142135
    %166 = vst.msk [vmem:[#allocation2] sm:$0xff] %vm33, %v162
    %167 = vst.msk [vmem:[#allocation2 + $0x8] sm:$0xff] %vm33, %v163
    %168 = vst.msk [vmem:[#allocation2 + $0x10] sm:$0xff] %vm33, %v164
    %169 = vst.msk [vmem:[#allocation2 + $0x18] sm:$0xff] %vm33, %v165
    %v170 = vlaneseq
    %v171 = vshrl.u32 %v170, 7
    %v172 = vadd.s32 %v171, 8
    %v173 = vadd.s32 %v171, 16
    %v174 = vadd.s32 %v171, 24
    %v175 = vlaneseq
    %v176 = vand.u32 %v175, 127
    %vm177 = vcmp.eq.s32.totalorder %v171, %v176
    %vm178 = vcmp.eq.s32.totalorder %v172, %v176
    %vm179 = vcmp.eq.s32.totalorder %v173, %v176
    %vm180 = vcmp.eq.s32.totalorder %v174, %v176
    %v181 = vsel %vm177, 1, 0
    %v182 = vsel %vm178, 1, 0
    %v183 = vsel %vm179, 1, 0
    %v184 = vsel %vm180, 1, 0
    %v185 = vcvt.s32.f32 %v181
    %v186 = vcvt.s32.f32 %v182
    %v187 = vcvt.s32.f32 %v183
    %v188 = vcvt.s32.f32 %v184
    %189 = vst.msk [vmem:[#allocation6] sm:$0xff] %vm33, %v185
    %190 = vst.msk [vmem:[#allocation6 + $0x8] sm:$0xff] %vm33, %v186
    %191 = vst.msk [vmem:[#allocation6 + $0x10] sm:$0xff] %vm33, %v187
    %192 = vst.msk [vmem:[#allocation6 + $0x18] sm:$0xff] %vm33, %v188
    %v193 = vld [vmem:[#allocation2] sm:$0x1]
    %v194 = vld [vmem:[#allocation6] sm:$0xff]
    %v195 = vld [vmem:[#allocation6 + $0x8] sm:$0xff]
    %v196 = vld [vmem:[#allocation6 + $0x10] sm:$0xff]
    %v197 = vld [vmem:[#allocation6 + $0x18] sm:$0xff]
    %v198 = vperm.slane %v193, 0
    %v199 = vmul.f32 %v194, %v198
    %v200 = vmul.f32 %v195, %v198
    %v201 = vmul.f32 %v196, %v198
    %v202 = vmul.f32 %v197, %v198
    %v203 = vsel %vm33, %v199, 0.0
    %204 = vadd.xlane.f32.xlu0 %v203
    %v205 = vpop.xlane.xlu0 %204
    %v206 = vsel %vm33, %v200, 0.0
    %207 = vadd.xlane.f32.xlu0 %v206
    %v208 = vpop.xlane.xlu0 %207
    %v209 = vsel %vm33, %v201, 0.0
    %210 = vadd.xlane.f32.xlu0 %v209
    %v211 = vpop.xlane.xlu0 %210
    %v212 = vsel %vm33, %v202, 0.0
    %213 = vadd.xlane.f32.xlu0 %v212
    %v214 = vpop.xlane.xlu0 %213
    %v215 = vmul.f32 %v205, %v198
    %v216 = vmul.f32 %v208, %v198
    %v217 = vmul.f32 %v211, %v198
    %v218 = vmul.f32 %v214, %v198
    %v219 = vsub.f32 %v194, %v215
    %v220 = vsub.f32 %v195, %v216
    %v221 = vsub.f32 %v196, %v217
    %v222 = vsub.f32 %v197, %v218
    %223 = vst.msk [vmem:[#allocation6] sm:$0xff] %vm33, %v219
    %224 = vst.msk [vmem:[#allocation6 + $0x8] sm:$0xff] %vm33, %v220
    %225 = vst.msk [vmem:[#allocation6 + $0x10] sm:$0xff] %vm33, %v221
    %226 = vst.msk [vmem:[#allocation6 + $0x18] sm:$0xff] %vm33, %v222
    %v227 = vld [vmem:[#allocation2 + $0x1] sm:$0x1]
    %v228 = vld [vmem:[#allocation6] sm:$0xff]
    %v229 = vld [vmem:[#allocation6 + $0x8] sm:$0xff]
    %v230 = vld [vmem:[#allocation6 + $0x10] sm:$0xff]
    %v231 = vld [vmem:[#allocation6 + $0x18] sm:$0xff]
    %v232 = vperm.slane %v227, 0
    %v233 = vmul.f32 %v228, %v232
    %v234 = vmul.f32 %v229, %v232
    %v235 = vmul.f32 %v230, %v232
    %v236 = vmul.f32 %v231, %v232
    %v237 = vsel %vm33, %v233, 0.0
    %238 = vadd.xlane.f32.xlu0 %v237
    %v239 = vpop.xlane.xlu0 %238
    %v240 = vsel %vm33, %v234, 0.0
    %241 = vadd.xlane.f32.xlu0 %v240
    %v242 = vpop.xlane.xlu0 %241
    %v243 = vsel %vm33, %v235, 0.0
    %244 = vadd.xlane.f32.xlu0 %v243
    %v245 = vpop.xlane.xlu0 %244
    %v246 = vsel %vm33, %v236, 0.0
    %247 = vadd.xlane.f32.xlu0 %v246
    %v248 = vpop.xlane.xlu0 %247
    %v249 = vmul.f32 %v239, %v232
    %v250 = vmul.f32 %v242, %v232
    %v251 = vmul.f32 %v245, %v232
    %v252 = vmul.f32 %v248, %v232
    %v253 = vsub.f32 %v228, %v249
    %v254 = vsub.f32 %v229, %v250
    %v255 = vsub.f32 %v230, %v251
    %v256 = vsub.f32 %v231, %v252
    %257 = vst.msk [vmem:[#allocation6] sm:$0xff] %vm33, %v253
    %258 = vst.msk [vmem:[#allocation6 + $0x8] sm:$0xff] %vm33, %v254
    %259 = vst.msk [vmem:[#allocation6 + $0x10] sm:$0xff] %vm33, %v255
    %260 = vst.msk [vmem:[#allocation6 + $0x18] sm:$0xff] %vm33, %v256
    %v261 = vld [vmem:[#allocation2 + $0x2] sm:$0x1]
    %v262 = vld [vmem:[#allocation6] sm:$0xff]
    %v263 = vld [vmem:[#allocation6 + $0x8] sm:$0xff]
    %v264 = vld [vmem:[#allocation6 + $0x10] sm:$0xff]
    %v265 = vld [vmem:[#allocation6 + $0x18] sm:$0xff]
    %v266 = vperm.slane %v261, 0
    %v267 = vmul.f32 %v262, %v266
    %v268 = vmul.f32 %v263, %v266
    %v269 = vmul.f32 %v264, %v266
    %v270 = vmul.f32 %v265, %v266
    %v271 = vsel %vm33, %v267, 0.0
    %272 = vadd.xlane.f32.xlu0 %v271
    %v273 = vpop.xlane.xlu0 %272
    %v274 = vsel %vm33, %v268, 0.0
    %275 = vadd.xlane.f32.xlu0 %v274
    %v276 = vpop.xlane.xlu0 %275
    %v277 = vsel %vm33, %v269, 0.0
    %278 = vadd.xlane.f32.xlu0 %v277
    %v279 = vpop.xlane.xlu0 %278
    %v280 = vsel %vm33, %v270, 0.0
    %281 = vadd.xlane.f32.xlu0 %v280
    %v282 = vpop.xlane.xlu0 %281
    %v283 = vmul.f32 %v273, %v266
    %v284 = vmul.f32 %v276, %v266
    %v285 = vmul.f32 %v279, %v266
    %v286 = vmul.f32 %v282, %v266
    %v287 = vsub.f32 %v262, %v283
    %v288 = vsub.f32 %v263, %v284
    %v289 = vsub.f32 %v264, %v285
    %v290 = vsub.f32 %v265, %v286
    %291 = vst.msk [vmem:[#allocation6] sm:$0xff] %vm33, %v287
    %292 = vst.msk [vmem:[#allocation6 + $0x8] sm:$0xff] %vm33, %v288
    %293 = vst.msk [vmem:[#allocation6 + $0x10] sm:$0xff] %vm33, %v289
    %294 = vst.msk [vmem:[#allocation6 + $0x18] sm:$0xff] %vm33, %v290
    %v295 = vld [vmem:[#allocation2 + $0x3] sm:$0x1]
    %v296 = vld [vmem:[#allocation6] sm:$0xff]
    %v297 = vld [vmem:[#allocation6 + $0x8] sm:$0xff]
    %v298 = vld [vmem:[#allocation6 + $0x10] sm:$0xff]
    %v299 = vld [vmem:[#allocation6 + $0x18] sm:$0xff]
    %v300 = vperm.slane %v295, 0
    %v301 = vmul.f32 %v296, %v300
    %v302 = vmul.f32 %v297, %v300
    %v303 = vmul.f32 %v298, %v300
    %v304 = vmul.f32 %v299, %v300
    %v305 = vsel %vm33, %v301, 0.0
    %306 = vadd.xlane.f32.xlu0 %v305
    %v307 = vpop.xlane.xlu0 %306
    %v308 = vsel %vm33, %v302, 0.0
    %309 = vadd.xlane.f32.xlu0 %v308
    %v310 = vpop.xlane.xlu0 %309
    %v311 = vsel %vm33, %v303, 0.0
    %312 = vadd.xlane.f32.xlu0 %v311
    %v313 = vpop.xlane.xlu0 %312
    %v314 = vsel %vm33, %v304, 0.0
    %315 = vadd.xlane.f32.xlu0 %v314
    %v316 = vpop.xlane.xlu0 %315
    %v317 = vmul.f32 %v307, %v300
    %v318 = vmul.f32 %v310, %v300
    %v319 = vmul.f32 %v313, %v300
    %v320 = vmul.f32 %v316, %v300
    %v321 = vsub.f32 %v296, %v317
    %v322 = vsub.f32 %v297, %v318
    %v323 = vsub.f32 %v298, %v319
    %v324 = vsub.f32 %v299, %v320
    %325 = vst.msk [vmem:[#allocation6] sm:$0xff] %vm33, %v321
    %326 = vst.msk [vmem:[#allocation6 + $0x8] sm:$0xff] %vm33, %v322
    %327 = vst.msk [vmem:[#allocation6 + $0x10] sm:$0xff] %vm33, %v323
    %328 = vst.msk [vmem:[#allocation6 + $0x18] sm:$0xff] %vm33, %v324
    %v329 = vld [vmem:[#allocation2 + $0x4] sm:$0x1]
    %v330 = vld [vmem:[#allocation6] sm:$0xff]
    %v331 = vld [vmem:[#allocation6 + $0x8] sm:$0xff]
    %v332 = vld [vmem:[#allocation6 + $0x10] sm:$0xff]
    %v333 = vld [vmem:[#allocation6 + $0x18] sm:$0xff]
    %v334 = vperm.slane %v329, 0
    %v335 = vmul.f32 %v330, %v334
    %v336 = vmul.f32 %v331, %v334
    %v337 = vmul.f32 %v332, %v334
    %v338 = vmul.f32 %v333, %v334
    %v339 = vsel %vm33, %v335, 0.0
    %340 = vadd.xlane.f32.xlu0 %v339
    %v341 = vpop.xlane.xlu0 %340
    %v342 = vsel %vm33, %v336, 0.0
    %343 = vadd.xlane.f32.xlu0 %v342
    %v344 = vpop.xlane.xlu0 %343
    %v345 = vsel %vm33, %v337, 0.0
    %346 = vadd.xlane.f32.xlu0 %v345
    %v347 = vpop.xlane.xlu0 %346
    %v348 = vsel %vm33, %v338, 0.0
    %349 = vadd.xlane.f32.xlu0 %v348
    %v350 = vpop.xlane.xlu0 %349
    %v351 = vmul.f32 %v341, %v334
    %v352 = vmul.f32 %v344, %v334
    %v353 = vmul.f32 %v347, %v334
    %v354 = vmul.f32 %v350, %v334
    %v355 = vsub.f32 %v330, %v351
    %v356 = vsub.f32 %v331, %v352
    %v357 = vsub.f32 %v332, %v353
    %v358 = vsub.f32 %v333, %v354
    %359 = vst.msk [vmem:[#allocation6] sm:$0xff] %vm33, %v355
    %360 = vst.msk [vmem:[#allocation6 + $0x8] sm:$0xff] %vm33, %v356
    %361 = vst.msk [vmem:[#allocation6 + $0x10] sm:$0xff] %vm33, %v357
    %362 = vst.msk [vmem:[#allocation6 + $0x18] sm:$0xff] %vm33, %v358
    %v363 = vld [vmem:[#allocation2 + $0x5] sm:$0x1]
    %v364 = vld [vmem:[#allocation6] sm:$0xff]
    %v365 = vld [vmem:[#allocation6 + $0x8] sm:$0xff]
    %v366 = vld [vmem:[#allocation6 + $0x10] sm:$0xff]
    %v367 = vld [vmem:[#allocation6 + $0x18] sm:$0xff]
    %v368 = vperm.slane %v363, 0
    %v369 = vmul.f32 %v364, %v368
    %v370 = vmul.f32 %v365, %v368
    %v371 = vmul.f32 %v366, %v368
    %v372 = vmul.f32 %v367, %v368
    %v373 = vsel %vm33, %v369, 0.0
    %374 = vadd.xlane.f32.xlu0 %v373
    %v375 = vpop.xlane.xlu0 %374
    %v376 = vsel %vm33, %v370, 0.0
    %377 = vadd.xlane.f32.xlu0 %v376
    %v378 = vpop.xlane.xlu0 %377
    %v379 = vsel %vm33, %v371, 0.0
    %380 = vadd.xlane.f32.xlu0 %v379
    %v381 = vpop.xlane.xlu0 %380
    %v382 = vsel %vm33, %v372, 0.0
    %383 = vadd.xlane.f32.xlu0 %v382
    %v384 = vpop.xlane.xlu0 %383
    %v385 = vmul.f32 %v375, %v368
    %v386 = vmul.f32 %v378, %v368
    %v387 = vmul.f32 %v381, %v368
    %v388 = vmul.f32 %v384, %v368
    %v389 = vsub.f32 %v364, %v385
    %v390 = vsub.f32 %v365, %v386
    %v391 = vsub.f32 %v366, %v387
    %v392 = vsub.f32 %v367, %v388
    %393 = vst.msk [vmem:[#allocation6] sm:$0xff] %vm33, %v389
    %394 = vst.msk [vmem:[#allocation6 + $0x8] sm:$0xff] %vm33, %v390
    %395 = vst.msk [vmem:[#allocation6 + $0x10] sm:$0xff] %vm33, %v391
    %396 = vst.msk [vmem:[#allocation6 + $0x18] sm:$0xff] %vm33, %v392
    %v397 = vld [vmem:[#allocation2 + $0x6] sm:$0x1]
    %v398 = vld [vmem:[#allocation6] sm:$0xff]
    %v399 = vld [vmem:[#allocation6 + $0x8] sm:$0xff]
    %v400 = vld [vmem:[#allocation6 + $0x10] sm:$0xff]
    %v401 = vld [vmem:[#allocation6 + $0x18] sm:$0xff]
    %v402 = vperm.slane %v397, 0
    %v403 = vmul.f32 %v398, %v402
    %v404 = vmul.f32 %v399, %v402
    %v405 = vmul.f32 %v400, %v402
    %v406 = vmul.f32 %v401, %v402
    %v407 = vsel %vm33, %v403, 0.0
    %408 = vadd.xlane.f32.xlu0 %v407
    %v409 = vpop.xlane.xlu0 %408
    %v410 = vsel %vm33, %v404, 0.0
    %411 = vadd.xlane.f32.xlu0 %v410
    %v412 = vpop.xlane.xlu0 %411
    %v413 = vsel %vm33, %v405, 0.0
    %414 = vadd.xlane.f32.xlu0 %v413
    %v415 = vpop.xlane.xlu0 %414
    %v416 = vsel %vm33, %v406, 0.0
    %417 = vadd.xlane.f32.xlu0 %v416
    %v418 = vpop.xlane.xlu0 %417
    %v419 = vmul.f32 %v409, %v402
    %v420 = vmul.f32 %v412, %v402
    %v421 = vmul.f32 %v415, %v402
    %v422 = vmul.f32 %v418, %v402
    %v423 = vsub.f32 %v398, %v419
    %v424 = vsub.f32 %v399, %v420
    %v425 = vsub.f32 %v400, %v421
    %v426 = vsub.f32 %v401, %v422
    %427 = vst.msk [vmem:[#allocation6] sm:$0xff] %vm33, %v423
    %428 = vst.msk [vmem:[#allocation6 + $0x8] sm:$0xff] %vm33, %v424
    %429 = vst.msk [vmem:[#allocation6 + $0x10] sm:$0xff] %vm33, %v425
    %430 = vst.msk [vmem:[#allocation6 + $0x18] sm:$0xff] %vm33, %v426
    %v431 = vld [vmem:[#allocation2 + $0x7] sm:$0x1]
    %v432 = vld [vmem:[#allocation6] sm:$0xff]
    %v433 = vld [vmem:[#allocation6 + $0x8] sm:$0xff]
    %v434 = vld [vmem:[#allocation6 + $0x10] sm:$0xff]
    %v435 = vld [vmem:[#allocation6 + $0x18] sm:$0xff]
    %v436 = vperm.slane %v431, 0
    %v437 = vmul.f32 %v432, %v436
    %v438 = vmul.f32 %v433, %v436
    %v439 = vmul.f32 %v434, %v436
    %v440 = vmul.f32 %v435, %v436
    %v441 = vsel %vm33, %v437, 0.0
    %442 = vadd.xlane.f32.xlu0 %v441
    %v443 = vpop.xlane.xlu0 %442
    %v444 = vsel %vm33, %v438, 0.0
    %445 = vadd.xlane.f32.xlu0 %v444
    %v446 = vpop.xlane.xlu0 %445
    %v447 = vsel %vm33, %v439, 0.0
    %448 = vadd.xlane.f32.xlu0 %v447
    %v449 = vpop.xlane.xlu0 %448
    %v450 = vsel %vm33, %v440, 0.0
    %451 = vadd.xlane.f32.xlu0 %v450
    %v452 = vpop.xlane.xlu0 %451
    %v453 = vmul.f32 %v443, %v436
    %v454 = vmul.f32 %v446, %v436
    %v455 = vmul.f32 %v449, %v436
    %v456 = vmul.f32 %v452, %v436
    %v457 = vsub.f32 %v432, %v453
    %v458 = vsub.f32 %v433, %v454
    %v459 = vsub.f32 %v434, %v455
    %v460 = vsub.f32 %v435, %v456
    %461 = vst.msk [vmem:[#allocation6] sm:$0xff] %vm33, %v457
    %462 = vst.msk [vmem:[#allocation6 + $0x8] sm:$0xff] %vm33, %v458
    %463 = vst.msk [vmem:[#allocation6 + $0x10] sm:$0xff] %vm33, %v459
    %464 = vst.msk [vmem:[#allocation6 + $0x18] sm:$0xff] %vm33, %v460
    %v465 = vld [vmem:[#allocation2 + $0x8] sm:$0x1]
    %v466 = vld [vmem:[#allocation6] sm:$0xff]
    %v467 = vld [vmem:[#allocation6 + $0x8] sm:$0xff]
    %v468 = vld [vmem:[#allocation6 + $0x10] sm:$0xff]
    %v469 = vld [vmem:[#allocation6 + $0x18] sm:$0xff]
    %v470 = vperm.slane %v465, 0
    %v471 = vmul.f32 %v466, %v470
    %v472 = vmul.f32 %v467, %v470
    %v473 = vmul.f32 %v468, %v470
    %v474 = vmul.f32 %v469, %v470
    %v475 = vsel %vm33, %v471, 0.0
    %476 = vadd.xlane.f32.xlu0 %v475
    %v477 = vpop.xlane.xlu0 %476
    %v478 = vsel %vm33, %v472, 0.0
    %479 = vadd.xlane.f32.xlu0 %v478
    %v480 = vpop.xlane.xlu0 %479
    %v481 = vsel %vm33, %v473, 0.0
    %482 = vadd.xlane.f32.xlu0 %v481
    %v483 = vpop.xlane.xlu0 %482
    %v484 = vsel %vm33, %v474, 0.0
    %485 = vadd.xlane.f32.xlu0 %v484
    %v486 = vpop.xlane.xlu0 %485
    %v487 = vmul.f32 %v477, %v470
    %v488 = vmul.f32 %v480, %v470
    %v489 = vmul.f32 %v483, %v470
    %v490 = vmul.f32 %v486, %v470
    %v491 = vsub.f32 %v466, %v487
    %v492 = vsub.f32 %v467, %v488
    %v493 = vsub.f32 %v468, %v489
    %v494 = vsub.f32 %v469, %v490
    %495 = vst.msk [vmem:[#allocation6] sm:$0xff] %vm33, %v491
    %496 = vst.msk [vmem:[#allocation6 + $0x8] sm:$0xff] %vm33, %v492
    %497 = vst.msk [vmem:[#allocation6 + $0x10] sm:$0xff] %vm33, %v493
    %498 = vst.msk [vmem:[#allocation6 + $0x18] sm:$0xff] %vm33, %v494
    %v499 = vld [vmem:[#allocation2 + $0x9] sm:$0x1]
    %v500 = vld [vmem:[#allocation6] sm:$0xff]
    %v501 = vld [vmem:[#allocation6 + $0x8] sm:$0xff]
    %v502 = vld [vmem:[#allocation6 + $0x10] sm:$0xff]
    %v503 = vld [vmem:[#allocation6 + $0x18] sm:$0xff]
    %v504 = vperm.slane %v499, 0
    %v505 = vmul.f32 %v500, %v504
    %v506 = vmul.f32 %v501, %v504
    %v507 = vmul.f32 %v502, %v504
    %v508 = vmul.f32 %v503, %v504
    %v509 = vsel %vm33, %v505, 0.0
    %510 = vadd.xlane.f32.xlu0 %v509
    %v511 = vpop.xlane.xlu0 %510
    %v512 = vsel %vm33, %v506, 0.0
    %513 = vadd.xlane.f32.xlu0 %v512
    %v514 = vpop.xlane.xlu0 %513
    %v515 = vsel %vm33, %v507, 0.0
    %516 = vadd.xlane.f32.xlu0 %v515
    %v517 = vpop.xlane.xlu0 %516
    %v518 = vsel %vm33, %v508, 0.0
    %519 = vadd.xlane.f32.xlu0 %v518
    %v520 = vpop.xlane.xlu0 %519
    %v521 = vmul.f32 %v511, %v504
    %v522 = vmul.f32 %v514, %v504
    %v523 = vmul.f32 %v517, %v504
    %v524 = vmul.f32 %v520, %v504
    %v525 = vsub.f32 %v500, %v521
    %v526 = vsub.f32 %v501, %v522
    %v527 = vsub.f32 %v502, %v523
    %v528 = vsub.f32 %v503, %v524
    %529 = vst.msk [vmem:[#allocation6] sm:$0xff] %vm33, %v525
    %530 = vst.msk [vmem:[#allocation6 + $0x8] sm:$0xff] %vm33, %v526
    %531 = vst.msk [vmem:[#allocation6 + $0x10] sm:$0xff] %vm33, %v527
    %532 = vst.msk [vmem:[#allocation6 + $0x18] sm:$0xff] %vm33, %v528
    %v533 = vld [vmem:[#allocation2 + $0xa] sm:$0x1]
    %v534 = vld [vmem:[#allocation6] sm:$0xff]
    %v535 = vld [vmem:[#allocation6 + $0x8] sm:$0xff]
    %v536 = vld [vmem:[#allocation6 + $0x10] sm:$0xff]
    %v537 = vld [vmem:[#allocation6 + $0x18] sm:$0xff]
    %v538 = vperm.slane %v533, 0
    %v539 = vmul.f32 %v534, %v538
    %v540 = vmul.f32 %v535, %v538
    %v541 = vmul.f32 %v536, %v538
    %v542 = vmul.f32 %v537, %v538
    %v543 = vsel %vm33, %v539, 0.0
    %544 = vadd.xlane.f32.xlu0 %v543
    %v545 = vpop.xlane.xlu0 %544
    %v546 = vsel %vm33, %v540, 0.0
    %547 = vadd.xlane.f32.xlu0 %v546
    %v548 = vpop.xlane.xlu0 %547
    %v549 = vsel %vm33, %v541, 0.0
    %550 = vadd.xlane.f32.xlu0 %v549
    %v551 = vpop.xlane.xlu0 %550
    %v552 = vsel %vm33, %v542, 0.0
    %553 = vadd.xlane.f32.xlu0 %v552
    %v554 = vpop.xlane.xlu0 %553
    %v555 = vmul.f32 %v545, %v538
    %v556 = vmul.f32 %v548, %v538
    %v557 = vmul.f32 %v551, %v538
    %v558 = vmul.f32 %v554, %v538
    %v559 = vsub.f32 %v534, %v555
    %v560 = vsub.f32 %v535, %v556
    %v561 = vsub.f32 %v536, %v557
    %v562 = vsub.f32 %v537, %v558
    %563 = vst.msk [vmem:[#allocation6] sm:$0xff] %vm33, %v559
    %564 = vst.msk [vmem:[#allocation6 + $0x8] sm:$0xff] %vm33, %v560
    %565 = vst.msk [vmem:[#allocation6 + $0x10] sm:$0xff] %vm33, %v561
    %566 = vst.msk [vmem:[#allocation6 + $0x18] sm:$0xff] %vm33, %v562
    %v567 = vld [vmem:[#allocation2 + $0xb] sm:$0x1]
    %v568 = vld [vmem:[#allocation6] sm:$0xff]
    %v569 = vld [vmem:[#allocation6 + $0x8] sm:$0xff]
    %v570 = vld [vmem:[#allocation6 + $0x10] sm:$0xff]
    %v571 = vld [vmem:[#allocation6 + $0x18] sm:$0xff]
    %v572 = vperm.slane %v567, 0
    %v573 = vmul.f32 %v568, %v572
    %v574 = vmul.f32 %v569, %v572
    %v575 = vmul.f32 %v570, %v572
    %v576 = vmul.f32 %v571, %v572
    %v577 = vsel %vm33, %v573, 0.0
    %578 = vadd.xlane.f32.xlu0 %v577
    %v579 = vpop.xlane.xlu0 %578
    %v580 = vsel %vm33, %v574, 0.0
    %581 = vadd.xlane.f32.xlu0 %v580
    %v582 = vpop.xlane.xlu0 %581
    %v583 = vsel %vm33, %v575, 0.0
    %584 = vadd.xlane.f32.xlu0 %v583
    %v585 = vpop.xlane.xlu0 %584
    %v586 = vsel %vm33, %v576, 0.0
    %587 = vadd.xlane.f32.xlu0 %v586
    %v588 = vpop.xlane.xlu0 %587
    %v589 = vmul.f32 %v579, %v572
    %v590 = vmul.f32 %v582, %v572
    %v591 = vmul.f32 %v585, %v572
    %v592 = vmul.f32 %v588, %v572
    %v593 = vsub.f32 %v568, %v589
    %v594 = vsub.f32 %v569, %v590
    %v595 = vsub.f32 %v570, %v591
    %v596 = vsub.f32 %v571, %v592
    %597 = vst.msk [vmem:[#allocation6] sm:$0xff] %vm33, %v593
    %598 = vst.msk [vmem:[#allocation6 + $0x8] sm:$0xff] %vm33, %v594
    %599 = vst.msk [vmem:[#allocation6 + $0x10] sm:$0xff] %vm33, %v595
    %600 = vst.msk [vmem:[#allocation6 + $0x18] sm:$0xff] %vm33, %v596
    %v601 = vld [vmem:[#allocation2 + $0xc] sm:$0x1]
    %v602 = vld [vmem:[#allocation6] sm:$0xff]
    %v603 = vld [vmem:[#allocation6 + $0x8] sm:$0xff]
    %v604 = vld [vmem:[#allocation6 + $0x10] sm:$0xff]
    %v605 = vld [vmem:[#allocation6 + $0x18] sm:$0xff]
    %v606 = vperm.slane %v601, 0
    %v607 = vmul.f32 %v602, %v606
    %v608 = vmul.f32 %v603, %v606
    %v609 = vmul.f32 %v604, %v606
    %v610 = vmul.f32 %v605, %v606
    %v611 = vsel %vm33, %v607, 0.0
    %612 = vadd.xlane.f32.xlu0 %v611
    %v613 = vpop.xlane.xlu0 %612
    %v614 = vsel %vm33, %v608, 0.0
    %615 = vadd.xlane.f32.xlu0 %v614
    %v616 = vpop.xlane.xlu0 %615
    %v617 = vsel %vm33, %v609, 0.0
    %618 = vadd.xlane.f32.xlu0 %v617
    %v619 = vpop.xlane.xlu0 %618
    %v620 = vsel %vm33, %v610, 0.0
    %621 = vadd.xlane.f32.xlu0 %v620
    %v622 = vpop.xlane.xlu0 %621
    %v623 = vmul.f32 %v613, %v606
    %v624 = vmul.f32 %v616, %v606
    %v625 = vmul.f32 %v619, %v606
    %v626 = vmul.f32 %v622, %v606
    %v627 = vsub.f32 %v602, %v623
    %v628 = vsub.f32 %v603, %v624
    %v629 = vsub.f32 %v604, %v625
    %v630 = vsub.f32 %v605, %v626
    %631 = vst.msk [vmem:[#allocation6] sm:$0xff] %vm33, %v627
    %632 = vst.msk [vmem:[#allocation6 + $0x8] sm:$0xff] %vm33, %v628
    %633 = vst.msk [vmem:[#allocation6 + $0x10] sm:$0xff] %vm33, %v629
    %634 = vst.msk [vmem:[#allocation6 + $0x18] sm:$0xff] %vm33, %v630
    %v635 = vld [vmem:[#allocation2 + $0xd] sm:$0x1]
    %v636 = vld [vmem:[#allocation6] sm:$0xff]
    %v637 = vld [vmem:[#allocation6 + $0x8] sm:$0xff]
    %v638 = vld [vmem:[#allocation6 + $0x10] sm:$0xff]
    %v639 = vld [vmem:[#allocation6 + $0x18] sm:$0xff]
    %v640 = vperm.slane %v635, 0
    %v641 = vmul.f32 %v636, %v640
    %v642 = vmul.f32 %v637, %v640
    %v643 = vmul.f32 %v638, %v640
    %v644 = vmul.f32 %v639, %v640
    %v645 = vsel %vm33, %v641, 0.0
    %646 = vadd.xlane.f32.xlu0 %v645
    %v647 = vpop.xlane.xlu0 %646
    %v648 = vsel %vm33, %v642, 0.0
    %649 = vadd.xlane.f32.xlu0 %v648
    %v650 = vpop.xlane.xlu0 %649
    %v651 = vsel %vm33, %v643, 0.0
    %652 = vadd.xlane.f32.xlu0 %v651
    %v653 = vpop.xlane.xlu0 %652
    %v654 = vsel %vm33, %v644, 0.0
    %655 = vadd.xlane.f32.xlu0 %v654
    %v656 = vpop.xlane.xlu0 %655
    %v657 = vmul.f32 %v647, %v640
    %v658 = vmul.f32 %v650, %v640
    %v659 = vmul.f32 %v653, %v640
    %v660 = vmul.f32 %v656, %v640
    %v661 = vsub.f32 %v636, %v657
    %v662 = vsub.f32 %v637, %v658
    %v663 = vsub.f32 %v638, %v659
    %v664 = vsub.f32 %v639, %v660
    %665 = vst.msk [vmem:[#allocation6] sm:$0xff] %vm33, %v661
    %666 = vst.msk [vmem:[#allocation6 + $0x8] sm:$0xff] %vm33, %v662
    %667 = vst.msk [vmem:[#allocation6 + $0x10] sm:$0xff] %vm33, %v663
    %668 = vst.msk [vmem:[#allocation6 + $0x18] sm:$0xff] %vm33, %v664
    %v669 = vld [vmem:[#allocation2 + $0xe] sm:$0x1]
    %v670 = vld [vmem:[#allocation6] sm:$0xff]
    %v671 = vld [vmem:[#allocation6 + $0x8] sm:$0xff]
    %v672 = vld [vmem:[#allocation6 + $0x10] sm:$0xff]
    %v673 = vld [vmem:[#allocation6 + $0x18] sm:$0xff]
    %v674 = vperm.slane %v669, 0
    %v675 = vmul.f32 %v670, %v674
    %v676 = vmul.f32 %v671, %v674
    %v677 = vmul.f32 %v672, %v674
    %v678 = vmul.f32 %v673, %v674
    %v679 = vsel %vm33, %v675, 0.0
    %680 = vadd.xlane.f32.xlu0 %v679
    %v681 = vpop.xlane.xlu0 %680
    %v682 = vsel %vm33, %v676, 0.0
    %683 = vadd.xlane.f32.xlu0 %v682
    %v684 = vpop.xlane.xlu0 %683
    %v685 = vsel %vm33, %v677, 0.0
    %686 = vadd.xlane.f32.xlu0 %v685
    %v687 = vpop.xlane.xlu0 %686
    %v688 = vsel %vm33, %v678, 0.0
    %689 = vadd.xlane.f32.xlu0 %v688
    %v690 = vpop.xlane.xlu0 %689
    %v691 = vmul.f32 %v681, %v674
    %v692 = vmul.f32 %v684, %v674
    %v693 = vmul.f32 %v687, %v674
    %v694 = vmul.f32 %v690, %v674
    %v695 = vsub.f32 %v670, %v691
    %v696 = vsub.f32 %v671, %v692
    %v697 = vsub.f32 %v672, %v693
    %v698 = vsub.f32 %v673, %v694
    %699 = vst.msk [vmem:[#allocation6] sm:$0xff] %vm33, %v695
    %700 = vst.msk [vmem:[#allocation6 + $0x8] sm:$0xff] %vm33, %v696
    %701 = vst.msk [vmem:[#allocation6 + $0x10] sm:$0xff] %vm33, %v697
    %702 = vst.msk [vmem:[#allocation6 + $0x18] sm:$0xff] %vm33, %v698
    %v703 = vld [vmem:[#allocation2 + $0xf] sm:$0x1]
    %v704 = vld [vmem:[#allocation6] sm:$0xff]
    %v705 = vld [vmem:[#allocation6 + $0x8] sm:$0xff]
    %v706 = vld [vmem:[#allocation6 + $0x10] sm:$0xff]
    %v707 = vld [vmem:[#allocation6 + $0x18] sm:$0xff]
    %v708 = vperm.slane %v703, 0
    %v709 = vmul.f32 %v704, %v708
    %v710 = vmul.f32 %v705, %v708
    %v711 = vmul.f32 %v706, %v708
    %v712 = vmul.f32 %v707, %v708
    %v713 = vsel %vm33, %v709, 0.0
    %714 = vadd.xlane.f32.xlu0 %v713
    %v715 = vpop.xlane.xlu0 %714
    %v716 = vsel %vm33, %v710, 0.0
    %717 = vadd.xlane.f32.xlu0 %v716
    %v718 = vpop.xlane.xlu0 %717
    %v719 = vsel %vm33, %v711, 0.0
    %720 = vadd.xlane.f32.xlu0 %v719
    %v721 = vpop.xlane.xlu0 %720
    %v722 = vsel %vm33, %v712, 0.0
    %723 = vadd.xlane.f32.xlu0 %v722
    %v724 = vpop.xlane.xlu0 %723
    %v725 = vmul.f32 %v715, %v708
    %v726 = vmul.f32 %v718, %v708
    %v727 = vmul.f32 %v721, %v708
    %v728 = vmul.f32 %v724, %v708
    %v729 = vsub.f32 %v704, %v725
    %v730 = vsub.f32 %v705, %v726
    %v731 = vsub.f32 %v706, %v727
    %v732 = vsub.f32 %v707, %v728
    %733 = vst.msk [vmem:[#allocation6] sm:$0xff] %vm33, %v729
    %734 = vst.msk [vmem:[#allocation6 + $0x8] sm:$0xff] %vm33, %v730
    %735 = vst.msk [vmem:[#allocation6 + $0x10] sm:$0xff] %vm33, %v731
    %736 = vst.msk [vmem:[#allocation6 + $0x18] sm:$0xff] %vm33, %v732
    %v737 = vld [vmem:[#allocation2 + $0x10] sm:$0x1]
    %v738 = vld [vmem:[#allocation6] sm:$0xff]
    %v739 = vld [vmem:[#allocation6 + $0x8] sm:$0xff]
    %v740 = vld [vmem:[#allocation6 + $0x10] sm:$0xff]
    %v741 = vld [vmem:[#allocation6 + $0x18] sm:$0xff]
    %v742 = vperm.slane %v737, 0
    %v743 = vmul.f32 %v738, %v742
    %v744 = vmul.f32 %v739, %v742
    %v745 = vmul.f32 %v740, %v742
    %v746 = vmul.f32 %v741, %v742
    %v747 = vsel %vm33, %v743, 0.0
    %748 = vadd.xlane.f32.xlu0 %v747
    %v749 = vpop.xlane.xlu0 %748
    %v750 = vsel %vm33, %v744, 0.0
    %751 = vadd.xlane.f32.xlu0 %v750
    %v752 = vpop.xlane.xlu0 %751
    %v753 = vsel %vm33, %v745, 0.0
    %754 = vadd.xlane.f32.xlu0 %v753
    %v755 = vpop.xlane.xlu0 %754
    %v756 = vsel %vm33, %v746, 0.0
    %757 = vadd.xlane.f32.xlu0 %v756
    %v758 = vpop.xlane.xlu0 %757
    %v759 = vmul.f32 %v749, %v742
    %v760 = vmul.f32 %v752, %v742
    %v761 = vmul.f32 %v755, %v742
    %v762 = vmul.f32 %v758, %v742
    %v763 = vsub.f32 %v738, %v759
    %v764 = vsub.f32 %v739, %v760
    %v765 = vsub.f32 %v740, %v761
    %v766 = vsub.f32 %v741, %v762
    %767 = vst.msk [vmem:[#allocation6] sm:$0xff] %vm33, %v763
    %768 = vst.msk [vmem:[#allocation6 + $0x8] sm:$0xff] %vm33, %v764
    %769 = vst.msk [vmem:[#allocation6 + $0x10] sm:$0xff] %vm33, %v765
    %770 = vst.msk [vmem:[#allocation6 + $0x18] sm:$0xff] %vm33, %v766
    %v771 = vld [vmem:[#allocation2 + $0x11] sm:$0x1]
    %v772 = vld [vmem:[#allocation6] sm:$0xff]
    %v773 = vld [vmem:[#allocation6 + $0x8] sm:$0xff]
    %v774 = vld [vmem:[#allocation6 + $0x10] sm:$0xff]
    %v775 = vld [vmem:[#allocation6 + $0x18] sm:$0xff]
    %v776 = vperm.slane %v771, 0
    %v777 = vmul.f32 %v772, %v776
    %v778 = vmul.f32 %v773, %v776
    %v779 = vmul.f32 %v774, %v776
    %v780 = vmul.f32 %v775, %v776
    %v781 = vsel %vm33, %v777, 0.0
    %782 = vadd.xlane.f32.xlu0 %v781
    %v783 = vpop.xlane.xlu0 %782
    %v784 = vsel %vm33, %v778, 0.0
    %785 = vadd.xlane.f32.xlu0 %v784
    %v786 = vpop.xlane.xlu0 %785
    %v787 = vsel %vm33, %v779, 0.0
    %788 = vadd.xlane.f32.xlu0 %v787
    %v789 = vpop.xlane.xlu0 %788
    %v790 = vsel %vm33, %v780, 0.0
    %791 = vadd.xlane.f32.xlu0 %v790
    %v792 = vpop.xlane.xlu0 %791
    %v793 = vmul.f32 %v783, %v776
    %v794 = vmul.f32 %v786, %v776
    %v795 = vmul.f32 %v789, %v776
    %v796 = vmul.f32 %v792, %v776
    %v797 = vsub.f32 %v772, %v793
    %v798 = vsub.f32 %v773, %v794
    %v799 = vsub.f32 %v774, %v795
    %v800 = vsub.f32 %v775, %v796
    %801 = vst.msk [vmem:[#allocation6] sm:$0xff] %vm33, %v797
    %802 = vst.msk [vmem:[#allocation6 + $0x8] sm:$0xff] %vm33, %v798
    %803 = vst.msk [vmem:[#allocation6 + $0x10] sm:$0xff] %vm33, %v799
    %804 = vst.msk [vmem:[#allocation6 + $0x18] sm:$0xff] %vm33, %v800
    %v805 = vld [vmem:[#allocation2 + $0x12] sm:$0x1]
    %v806 = vld [vmem:[#allocation6] sm:$0xff]
    %v807 = vld [vmem:[#allocation6 + $0x8] sm:$0xff]
    %v808 = vld [vmem:[#allocation6 + $0x10] sm:$0xff]
    %v809 = vld [vmem:[#allocation6 + $0x18] sm:$0xff]
    %v810 = vperm.slane %v805, 0
    %v811 = vmul.f32 %v806, %v810
    %v812 = vmul.f32 %v807, %v810
    %v813 = vmul.f32 %v808, %v810
    %v814 = vmul.f32 %v809, %v810
    %v815 = vsel %vm33, %v811, 0.0
    %816 = vadd.xlane.f32.xlu0 %v815
    %v817 = vpop.xlane.xlu0 %816
    %v818 = vsel %vm33, %v812, 0.0
    %819 = vadd.xlane.f32.xlu0 %v818
    %v820 = vpop.xlane.xlu0 %819
    %v821 = vsel %vm33, %v813, 0.0
    %822 = vadd.xlane.f32.xlu0 %v821
    %v823 = vpop.xlane.xlu0 %822
    %v824 = vsel %vm33, %v814, 0.0
    %825 = vadd.xlane.f32.xlu0 %v824
    %v826 = vpop.xlane.xlu0 %825
    %v827 = vmul.f32 %v817, %v810
    %v828 = vmul.f32 %v820, %v810
    %v829 = vmul.f32 %v823, %v810
    %v830 = vmul.f32 %v826, %v810
    %v831 = vsub.f32 %v806, %v827
    %v832 = vsub.f32 %v807, %v828
    %v833 = vsub.f32 %v808, %v829
    %v834 = vsub.f32 %v809, %v830
    %835 = vst.msk [vmem:[#allocation6] sm:$0xff] %vm33, %v831
    %836 = vst.msk [vmem:[#allocation6 + $0x8] sm:$0xff] %vm33, %v832
    %837 = vst.msk [vmem:[#allocation6 + $0x10] sm:$0xff] %vm33, %v833
    %838 = vst.msk [vmem:[#allocation6 + $0x18] sm:$0xff] %vm33, %v834
    %v839 = vld [vmem:[#allocation2 + $0x13] sm:$0x1]
    %v840 = vld [vmem:[#allocation6] sm:$0xff]
    %v841 = vld [vmem:[#allocation6 + $0x8] sm:$0xff]
    %v842 = vld [vmem:[#allocation6 + $0x10] sm:$0xff]
    %v843 = vld [vmem:[#allocation6 + $0x18] sm:$0xff]
    %v844 = vperm.slane %v839, 0
    %v845 = vmul.f32 %v840, %v844
    %v846 = vmul.f32 %v841, %v844
    %v847 = vmul.f32 %v842, %v844
    %v848 = vmul.f32 %v843, %v844
    %v849 = vsel %vm33, %v845, 0.0
    %850 = vadd.xlane.f32.xlu0 %v849
    %v851 = vpop.xlane.xlu0 %850
    %v852 = vsel %vm33, %v846, 0.0
    %853 = vadd.xlane.f32.xlu0 %v852
    %v854 = vpop.xlane.xlu0 %853
    %v855 = vsel %vm33, %v847, 0.0
    %856 = vadd.xlane.f32.xlu0 %v855
    %v857 = vpop.xlane.xlu0 %856
    %v858 = vsel %vm33, %v848, 0.0
    %859 = vadd.xlane.f32.xlu0 %v858
    %v860 = vpop.xlane.xlu0 %859
    %v861 = vmul.f32 %v851, %v844
    %v862 = vmul.f32 %v854, %v844
    %v863 = vmul.f32 %v857, %v844
    %v864 = vmul.f32 %v860, %v844
    %v865 = vsub.f32 %v840, %v861
    %v866 = vsub.f32 %v841, %v862
    %v867 = vsub.f32 %v842, %v863
    %v868 = vsub.f32 %v843, %v864
    %869 = vst.msk [vmem:[#allocation6] sm:$0xff] %vm33, %v865
    %870 = vst.msk [vmem:[#allocation6 + $0x8] sm:$0xff] %vm33, %v866
    %871 = vst.msk [vmem:[#allocation6 + $0x10] sm:$0xff] %vm33, %v867
    %872 = vst.msk [vmem:[#allocation6 + $0x18] sm:$0xff] %vm33, %v868
    %v873 = vld [vmem:[#allocation2 + $0x14] sm:$0x1]
    %v874 = vld [vmem:[#allocation6] sm:$0xff]
    %v875 = vld [vmem:[#allocation6 + $0x8] sm:$0xff]
    %v876 = vld [vmem:[#allocation6 + $0x10] sm:$0xff]
    %v877 = vld [vmem:[#allocation6 + $0x18] sm:$0xff]
    %v878 = vperm.slane %v873, 0
    %v879 = vmul.f32 %v874, %v878
    %v880 = vmul.f32 %v875, %v878
    %v881 = vmul.f32 %v876, %v878
    %v882 = vmul.f32 %v877, %v878
    %v883 = vsel %vm33, %v879, 0.0
    %884 = vadd.xlane.f32.xlu0 %v883
    %v885 = vpop.xlane.xlu0 %884
    %v886 = vsel %vm33, %v880, 0.0
    %887 = vadd.xlane.f32.xlu0 %v886
    %v888 = vpop.xlane.xlu0 %887
    %v889 = vsel %vm33, %v881, 0.0
    %890 = vadd.xlane.f32.xlu0 %v889
    %v891 = vpop.xlane.xlu0 %890
    %v892 = vsel %vm33, %v882, 0.0
    %893 = vadd.xlane.f32.xlu0 %v892
    %v894 = vpop.xlane.xlu0 %893
    %v895 = vmul.f32 %v885, %v878
    %v896 = vmul.f32 %v888, %v878
    %v897 = vmul.f32 %v891, %v878
    %v898 = vmul.f32 %v894, %v878
    %v899 = vsub.f32 %v874, %v895
    %v900 = vsub.f32 %v875, %v896
    %v901 = vsub.f32 %v876, %v897
    %v902 = vsub.f32 %v877, %v898
    %903 = vst.msk [vmem:[#allocation6] sm:$0xff] %vm33, %v899
    %904 = vst.msk [vmem:[#allocation6 + $0x8] sm:$0xff] %vm33, %v900
    %905 = vst.msk [vmem:[#allocation6 + $0x10] sm:$0xff] %vm33, %v901
    %906 = vst.msk [vmem:[#allocation6 + $0x18] sm:$0xff] %vm33, %v902
    %v907 = vld [vmem:[#allocation2 + $0x15] sm:$0x1]
    %v908 = vld [vmem:[#allocation6] sm:$0xff]
    %v909 = vld [vmem:[#allocation6 + $0x8] sm:$0xff]
    %v910 = vld [vmem:[#allocation6 + $0x10] sm:$0xff]
    %v911 = vld [vmem:[#allocation6 + $0x18] sm:$0xff]
    %v912 = vperm.slane %v907, 0
    %v913 = vmul.f32 %v908, %v912
    %v914 = vmul.f32 %v909, %v912
    %v915 = vmul.f32 %v910, %v912
    %v916 = vmul.f32 %v911, %v912
    %v917 = vsel %vm33, %v913, 0.0
    %918 = vadd.xlane.f32.xlu0 %v917
    %v919 = vpop.xlane.xlu0 %918
    %v920 = vsel %vm33, %v914, 0.0
    %921 = vadd.xlane.f32.xlu0 %v920
    %v922 = vpop.xlane.xlu0 %921
    %v923 = vsel %vm33, %v915, 0.0
    %924 = vadd.xlane.f32.xlu0 %v923
    %v925 = vpop.xlane.xlu0 %924
    %v926 = vsel %vm33, %v916, 0.0
    %927 = vadd.xlane.f32.xlu0 %v926
    %v928 = vpop.xlane.xlu0 %927
    %v929 = vmul.f32 %v919, %v912
    %v930 = vmul.f32 %v922, %v912
    %v931 = vmul.f32 %v925, %v912
    %v932 = vmul.f32 %v928, %v912
    %v933 = vsub.f32 %v908, %v929
    %v934 = vsub.f32 %v909, %v930
    %v935 = vsub.f32 %v910, %v931
    %v936 = vsub.f32 %v911, %v932
    %937 = vst.msk [vmem:[#allocation6] sm:$0xff] %vm33, %v933
    %938 = vst.msk [vmem:[#allocation6 + $0x8] sm:$0xff] %vm33, %v934
    %939 = vst.msk [vmem:[#allocation6 + $0x10] sm:$0xff] %vm33, %v935
    %940 = vst.msk [vmem:[#allocation6 + $0x18] sm:$0xff] %vm33, %v936
    %v941 = vld [vmem:[#allocation2 + $0x16] sm:$0x1]
    %v942 = vld [vmem:[#allocation6] sm:$0xff]
    %v943 = vld [vmem:[#allocation6 + $0x8] sm:$0xff]
    %v944 = vld [vmem:[#allocation6 + $0x10] sm:$0xff]
    %v945 = vld [vmem:[#allocation6 + $0x18] sm:$0xff]
    %v946 = vperm.slane %v941, 0
    %v947 = vmul.f32 %v942, %v946
    %v948 = vmul.f32 %v943, %v946
    %v949 = vmul.f32 %v944, %v946
    %v950 = vmul.f32 %v945, %v946
    %v951 = vsel %vm33, %v947, 0.0
    %952 = vadd.xlane.f32.xlu0 %v951
    %v953 = vpop.xlane.xlu0 %952
    %v954 = vsel %vm33, %v948, 0.0
    %955 = vadd.xlane.f32.xlu0 %v954
    %v956 = vpop.xlane.xlu0 %955
    %v957 = vsel %vm33, %v949, 0.0
    %958 = vadd.xlane.f32.xlu0 %v957
    %v959 = vpop.xlane.xlu0 %958
    %v960 = vsel %vm33, %v950, 0.0
    %961 = vadd.xlane.f32.xlu0 %v960
    %v962 = vpop.xlane.xlu0 %961
    %v963 = vmul.f32 %v953, %v946
    %v964 = vmul.f32 %v956, %v946
    %v965 = vmul.f32 %v959, %v946
    %v966 = vmul.f32 %v962, %v946
    %v967 = vsub.f32 %v942, %v963
    %v968 = vsub.f32 %v943, %v964
    %v969 = vsub.f32 %v944, %v965
    %v970 = vsub.f32 %v945, %v966
    %971 = vst.msk [vmem:[#allocation6] sm:$0xff] %vm33, %v967
    %972 = vst.msk [vmem:[#allocation6 + $0x8] sm:$0xff] %vm33, %v968
    %973 = vst.msk [vmem:[#allocation6 + $0x10] sm:$0xff] %vm33, %v969
    %974 = vst.msk [vmem:[#allocation6 + $0x18] sm:$0xff] %vm33, %v970
    %v975 = vld [vmem:[#allocation2 + $0x17] sm:$0x1]
    %v976 = vld [vmem:[#allocation6] sm:$0xff]
    %v977 = vld [vmem:[#allocation6 + $0x8] sm:$0xff]
    %v978 = vld [vmem:[#allocation6 + $0x10] sm:$0xff]
    %v979 = vld [vmem:[#allocation6 + $0x18] sm:$0xff]
    %v980 = vperm.slane %v975, 0
    %v981 = vmul.f32 %v976, %v980
    %v982 = vmul.f32 %v977, %v980
    %v983 = vmul.f32 %v978, %v980
    %v984 = vmul.f32 %v979, %v980
    %v985 = vsel %vm33, %v981, 0.0
    %986 = vadd.xlane.f32.xlu0 %v985
    %v987 = vpop.xlane.xlu0 %986
    %v988 = vsel %vm33, %v982, 0.0
    %989 = vadd.xlane.f32.xlu0 %v988
    %v990 = vpop.xlane.xlu0 %989
    %v991 = vsel %vm33, %v983, 0.0
    %992 = vadd.xlane.f32.xlu0 %v991
    %v993 = vpop.xlane.xlu0 %992
    %v994 = vsel %vm33, %v984, 0.0
    %995 = vadd.xlane.f32.xlu0 %v994
    %v996 = vpop.xlane.xlu0 %995
    %v997 = vmul.f32 %v987, %v980
    %v998 = vmul.f32 %v990, %v980
    %v999 = vmul.f32 %v993, %v980
    %v1000 = vmul.f32 %v996, %v980
    %v1001 = vsub.f32 %v976, %v997
    %v1002 = vsub.f32 %v977, %v998
    %v1003 = vsub.f32 %v978, %v999
    %v1004 = vsub.f32 %v979, %v1000
    %1005 = vst.msk [vmem:[#allocation6] sm:$0xff] %vm33, %v1001
    %1006 = vst.msk [vmem:[#allocation6 + $0x8] sm:$0xff] %vm33, %v1002
    %1007 = vst.msk [vmem:[#allocation6 + $0x10] sm:$0xff] %vm33, %v1003
    %1008 = vst.msk [vmem:[#allocation6 + $0x18] sm:$0xff] %vm33, %v1004
    %v1009 = vld [vmem:[#allocation2 + $0x18] sm:$0x1]
    %v1010 = vld [vmem:[#allocation6] sm:$0xff]
    %v1011 = vld [vmem:[#allocation6 + $0x8] sm:$0xff]
    %v1012 = vld [vmem:[#allocation6 + $0x10] sm:$0xff]
    %v1013 = vld [vmem:[#allocation6 + $0x18] sm:$0xff]
    %v1014 = vperm.slane %v1009, 0
    %v1015 = vmul.f32 %v1010, %v1014
    %v1016 = vmul.f32 %v1011, %v1014
    %v1017 = vmul.f32 %v1012, %v1014
    %v1018 = vmul.f32 %v1013, %v1014
    %v1019 = vsel %vm33, %v1015, 0.0
    %1020 = vadd.xlane.f32.xlu0 %v1019
    %v1021 = vpop.xlane.xlu0 %1020
    %v1022 = vsel %vm33, %v1016, 0.0
    %1023 = vadd.xlane.f32.xlu0 %v1022
    %v1024 = vpop.xlane.xlu0 %1023
    %v1025 = vsel %vm33, %v1017, 0.0
    %1026 = vadd.xlane.f32.xlu0 %v1025
    %v1027 = vpop.xlane.xlu0 %1026
    %v1028 = vsel %vm33, %v1018, 0.0
    %1029 = vadd.xlane.f32.xlu0 %v1028
    %v1030 = vpop.xlane.xlu0 %1029
    %v1031 = vmul.f32 %v1021, %v1014
    %v1032 = vmul.f32 %v1024, %v1014
    %v1033 = vmul.f32 %v1027, %v1014
    %v1034 = vmul.f32 %v1030, %v1014
    %v1035 = vsub.f32 %v1010, %v1031
    %v1036 = vsub.f32 %v1011, %v1032
    %v1037 = vsub.f32 %v1012, %v1033
    %v1038 = vsub.f32 %v1013, %v1034
    %1039 = vst.msk [vmem:[#allocation6] sm:$0xff] %vm33, %v1035
    %1040 = vst.msk [vmem:[#allocation6 + $0x8] sm:$0xff] %vm33, %v1036
    %1041 = vst.msk [vmem:[#allocation6 + $0x10] sm:$0xff] %vm33, %v1037
    %1042 = vst.msk [vmem:[#allocation6 + $0x18] sm:$0xff] %vm33, %v1038
    %v1043 = vld [vmem:[#allocation2 + $0x19] sm:$0x1]
    %v1044 = vld [vmem:[#allocation6] sm:$0xff]
    %v1045 = vld [vmem:[#allocation6 + $0x8] sm:$0xff]
    %v1046 = vld [vmem:[#allocation6 + $0x10] sm:$0xff]
    %v1047 = vld [vmem:[#allocation6 + $0x18] sm:$0xff]
    %v1048 = vperm.slane %v1043, 0
    %v1049 = vmul.f32 %v1044, %v1048
    %v1050 = vmul.f32 %v1045, %v1048
    %v1051 = vmul.f32 %v1046, %v1048
    %v1052 = vmul.f32 %v1047, %v1048
    %v1053 = vsel %vm33, %v1049, 0.0
    %1054 = vadd.xlane.f32.xlu0 %v1053
    %v1055 = vpop.xlane.xlu0 %1054
    %v1056 = vsel %vm33, %v1050, 0.0
    %1057 = vadd.xlane.f32.xlu0 %v1056
    %v1058 = vpop.xlane.xlu0 %1057
    %v1059 = vsel %vm33, %v1051, 0.0
    %1060 = vadd.xlane.f32.xlu0 %v1059
    %v1061 = vpop.xlane.xlu0 %1060
    %v1062 = vsel %vm33, %v1052, 0.0
    %1063 = vadd.xlane.f32.xlu0 %v1062
    %v1064 = vpop.xlane.xlu0 %1063
    %v1065 = vmul.f32 %v1055, %v1048
    %v1066 = vmul.f32 %v1058, %v1048
    %v1067 = vmul.f32 %v1061, %v1048
    %v1068 = vmul.f32 %v1064, %v1048
    %v1069 = vsub.f32 %v1044, %v1065
    %v1070 = vsub.f32 %v1045, %v1066
    %v1071 = vsub.f32 %v1046, %v1067
    %v1072 = vsub.f32 %v1047, %v1068
    %1073 = vst.msk [vmem:[#allocation6] sm:$0xff] %vm33, %v1069
    %1074 = vst.msk [vmem:[#allocation6 + $0x8] sm:$0xff] %vm33, %v1070
    %1075 = vst.msk [vmem:[#allocation6 + $0x10] sm:$0xff] %vm33, %v1071
    %1076 = vst.msk [vmem:[#allocation6 + $0x18] sm:$0xff] %vm33, %v1072
    %v1077 = vld [vmem:[#allocation2 + $0x1a] sm:$0x1]
    %v1078 = vld [vmem:[#allocation6] sm:$0xff]
    %v1079 = vld [vmem:[#allocation6 + $0x8] sm:$0xff]
    %v1080 = vld [vmem:[#allocation6 + $0x10] sm:$0xff]
    %v1081 = vld [vmem:[#allocation6 + $0x18] sm:$0xff]
    %v1082 = vperm.slane %v1077, 0
    %v1083 = vmul.f32 %v1078, %v1082
    %v1084 = vmul.f32 %v1079, %v1082
    %v1085 = vmul.f32 %v1080, %v1082
    %v1086 = vmul.f32 %v1081, %v1082
    %v1087 = vsel %vm33, %v1083, 0.0
    %1088 = vadd.xlane.f32.xlu0 %v1087
    %v1089 = vpop.xlane.xlu0 %1088
    %v1090 = vsel %vm33, %v1084, 0.0
    %1091 = vadd.xlane.f32.xlu0 %v1090
    %v1092 = vpop.xlane.xlu0 %1091
    %v1093 = vsel %vm33, %v1085, 0.0
    %1094 = vadd.xlane.f32.xlu0 %v1093
    %v1095 = vpop.xlane.xlu0 %1094
    %v1096 = vsel %vm33, %v1086, 0.0
    %1097 = vadd.xlane.f32.xlu0 %v1096
    %v1098 = vpop.xlane.xlu0 %1097
    %v1099 = vmul.f32 %v1089, %v1082
    %v1100 = vmul.f32 %v1092, %v1082
    %v1101 = vmul.f32 %v1095, %v1082
    %v1102 = vmul.f32 %v1098, %v1082
    %v1103 = vsub.f32 %v1078, %v1099
    %v1104 = vsub.f32 %v1079, %v1100
    %v1105 = vsub.f32 %v1080, %v1101
    %v1106 = vsub.f32 %v1081, %v1102
    %1107 = vst.msk [vmem:[#allocation6] sm:$0xff] %vm33, %v1103
    %1108 = vst.msk [vmem:[#allocation6 + $0x8] sm:$0xff] %vm33, %v1104
    %1109 = vst.msk [vmem:[#allocation6 + $0x10] sm:$0xff] %vm33, %v1105
    %1110 = vst.msk [vmem:[#allocation6 + $0x18] sm:$0xff] %vm33, %v1106
    %v1111 = vld [vmem:[#allocation2 + $0x1b] sm:$0x1]
    %v1112 = vld [vmem:[#allocation6] sm:$0xff]
    %v1113 = vld [vmem:[#allocation6 + $0x8] sm:$0xff]
    %v1114 = vld [vmem:[#allocation6 + $0x10] sm:$0xff]
    %v1115 = vld [vmem:[#allocation6 + $0x18] sm:$0xff]
    %v1116 = vperm.slane %v1111, 0
    %v1117 = vmul.f32 %v1112, %v1116
    %v1118 = vmul.f32 %v1113, %v1116
    %v1119 = vmul.f32 %v1114, %v1116
    %v1120 = vmul.f32 %v1115, %v1116
    %v1121 = vsel %vm33, %v1117, 0.0
    %1122 = vadd.xlane.f32.xlu0 %v1121
    %v1123 = vpop.xlane.xlu0 %1122
    %v1124 = vsel %vm33, %v1118, 0.0
    %1125 = vadd.xlane.f32.xlu0 %v1124
    %v1126 = vpop.xlane.xlu0 %1125
    %v1127 = vsel %vm33, %v1119, 0.0
    %1128 = vadd.xlane.f32.xlu0 %v1127
    %v1129 = vpop.xlane.xlu0 %1128
    %v1130 = vsel %vm33, %v1120, 0.0
    %1131 = vadd.xlane.f32.xlu0 %v1130
    %v1132 = vpop.xlane.xlu0 %1131
    %v1133 = vmul.f32 %v1123, %v1116
    %v1134 = vmul.f32 %v1126, %v1116
    %v1135 = vmul.f32 %v1129, %v1116
    %v1136 = vmul.f32 %v1132, %v1116
    %v1137 = vsub.f32 %v1112, %v1133
    %v1138 = vsub.f32 %v1113, %v1134
    %v1139 = vsub.f32 %v1114, %v1135
    %v1140 = vsub.f32 %v1115, %v1136
    %1141 = vst.msk [vmem:[#allocation6] sm:$0xff] %vm33, %v1137
    %1142 = vst.msk [vmem:[#allocation6 + $0x8] sm:$0xff] %vm33, %v1138
    %1143 = vst.msk [vmem:[#allocation6 + $0x10] sm:$0xff] %vm33, %v1139
    %1144 = vst.msk [vmem:[#allocation6 + $0x18] sm:$0xff] %vm33, %v1140
    %v1145 = vld [vmem:[#allocation2 + $0x1c] sm:$0x1]
    %v1146 = vld [vmem:[#allocation6] sm:$0xff]
    %v1147 = vld [vmem:[#allocation6 + $0x8] sm:$0xff]
    %v1148 = vld [vmem:[#allocation6 + $0x10] sm:$0xff]
    %v1149 = vld [vmem:[#allocation6 + $0x18] sm:$0xff]
    %v1150 = vperm.slane %v1145, 0
    %v1151 = vmul.f32 %v1146, %v1150
    %v1152 = vmul.f32 %v1147, %v1150
    %v1153 = vmul.f32 %v1148, %v1150
    %v1154 = vmul.f32 %v1149, %v1150
    %v1155 = vsel %vm33, %v1151, 0.0
    %1156 = vadd.xlane.f32.xlu0 %v1155
    %v1157 = vpop.xlane.xlu0 %1156
    %v1158 = vsel %vm33, %v1152, 0.0
    %1159 = vadd.xlane.f32.xlu0 %v1158
    %v1160 = vpop.xlane.xlu0 %1159
    %v1161 = vsel %vm33, %v1153, 0.0
    %1162 = vadd.xlane.f32.xlu0 %v1161
    %v1163 = vpop.xlane.xlu0 %1162
    %v1164 = vsel %vm33, %v1154, 0.0
    %1165 = vadd.xlane.f32.xlu0 %v1164
    %v1166 = vpop.xlane.xlu0 %1165
    %v1167 = vmul.f32 %v1157, %v1150
    %v1168 = vmul.f32 %v1160, %v1150
    %v1169 = vmul.f32 %v1163, %v1150
    %v1170 = vmul.f32 %v1166, %v1150
    %v1171 = vsub.f32 %v1146, %v1167
    %v1172 = vsub.f32 %v1147, %v1168
    %v1173 = vsub.f32 %v1148, %v1169
    %v1174 = vsub.f32 %v1149, %v1170
    %1175 = vst.msk [vmem:[#allocation6] sm:$0xff] %vm33, %v1171
    %1176 = vst.msk [vmem:[#allocation6 + $0x8] sm:$0xff] %vm33, %v1172
    %1177 = vst.msk [vmem:[#allocation6 + $0x10] sm:$0xff] %vm33, %v1173
    %1178 = vst.msk [vmem:[#allocation6 + $0x18] sm:$0xff] %vm33, %v1174
    %v1179 = vld [vmem:[#allocation2 + $0x1d] sm:$0x1]
    %v1180 = vld [vmem:[#allocation6] sm:$0xff]
    %v1181 = vld [vmem:[#allocation6 + $0x8] sm:$0xff]
    %v1182 = vld [vmem:[#allocation6 + $0x10] sm:$0xff]
    %v1183 = vld [vmem:[#allocation6 + $0x18] sm:$0xff]
    %v1184 = vperm.slane %v1179, 0
    %v1185 = vmul.f32 %v1180, %v1184
    %v1186 = vmul.f32 %v1181, %v1184
    %v1187 = vmul.f32 %v1182, %v1184
    %v1188 = vmul.f32 %v1183, %v1184
    %v1189 = vsel %vm33, %v1185, 0.0
    %1190 = vadd.xlane.f32.xlu0 %v1189
    %v1191 = vpop.xlane.xlu0 %1190
    %v1192 = vsel %vm33, %v1186, 0.0
    %1193 = vadd.xlane.f32.xlu0 %v1192
    %v1194 = vpop.xlane.xlu0 %1193
    %v1195 = vsel %vm33, %v1187, 0.0
    %1196 = vadd.xlane.f32.xlu0 %v1195
    %v1197 = vpop.xlane.xlu0 %1196
    %v1198 = vsel %vm33, %v1188, 0.0
    %1199 = vadd.xlane.f32.xlu0 %v1198
    %v1200 = vpop.xlane.xlu0 %1199
    %v1201 = vmul.f32 %v1191, %v1184
    %v1202 = vmul.f32 %v1194, %v1184
    %v1203 = vmul.f32 %v1197, %v1184
    %v1204 = vmul.f32 %v1200, %v1184
    %v1205 = vsub.f32 %v1180, %v1201
    %v1206 = vsub.f32 %v1181, %v1202
    %v1207 = vsub.f32 %v1182, %v1203
    %v1208 = vsub.f32 %v1183, %v1204
    %1209 = vst.msk [vmem:[#allocation6] sm:$0xff] %vm33, %v1205
    %1210 = vst.msk [vmem:[#allocation6 + $0x8] sm:$0xff] %vm33, %v1206
    %1211 = vst.msk [vmem:[#allocation6 + $0x10] sm:$0xff] %vm33, %v1207
    %1212 = vst.msk [vmem:[#allocation6 + $0x18] sm:$0xff] %vm33, %v1208
    %v1213 = vld [vmem:[#allocation2 + $0x1e] sm:$0x1]
    %v1214 = vld [vmem:[#allocation6] sm:$0xff]
    %v1215 = vld [vmem:[#allocation6 + $0x8] sm:$0xff]
    %v1216 = vld [vmem:[#allocation6 + $0x10] sm:$0xff]
    %v1217 = vld [vmem:[#allocation6 + $0x18] sm:$0xff]
    %v1218 = vperm.slane %v1213, 0
    %v1219 = vmul.f32 %v1214, %v1218
    %v1220 = vmul.f32 %v1215, %v1218
    %v1221 = vmul.f32 %v1216, %v1218
    %v1222 = vmul.f32 %v1217, %v1218
    %v1223 = vsel %vm33, %v1219, 0.0
    %1224 = vadd.xlane.f32.xlu0 %v1223
    %v1225 = vpop.xlane.xlu0 %1224
    %v1226 = vsel %vm33, %v1220, 0.0
    %1227 = vadd.xlane.f32.xlu0 %v1226
    %v1228 = vpop.xlane.xlu0 %1227
    %v1229 = vsel %vm33, %v1221, 0.0
    %1230 = vadd.xlane.f32.xlu0 %v1229
    %v1231 = vpop.xlane.xlu0 %1230
    %v1232 = vsel %vm33, %v1222, 0.0
    %1233 = vadd.xlane.f32.xlu0 %v1232
    %v1234 = vpop.xlane.xlu0 %1233
    %v1235 = vmul.f32 %v1225, %v1218
    %v1236 = vmul.f32 %v1228, %v1218
    %v1237 = vmul.f32 %v1231, %v1218
    %v1238 = vmul.f32 %v1234, %v1218
    %v1239 = vsub.f32 %v1214, %v1235
    %v1240 = vsub.f32 %v1215, %v1236
    %v1241 = vsub.f32 %v1216, %v1237
    %v1242 = vsub.f32 %v1217, %v1238
    %1243 = vst.msk [vmem:[#allocation6] sm:$0xff] %vm33, %v1239
    %1244 = vst.msk [vmem:[#allocation6 + $0x8] sm:$0xff] %vm33, %v1240
    %1245 = vst.msk [vmem:[#allocation6 + $0x10] sm:$0xff] %vm33, %v1241
    %1246 = vst.msk [vmem:[#allocation6 + $0x18] sm:$0xff] %vm33, %v1242
    %v1247 = vld [vmem:[#allocation2 + $0x1f] sm:$0x1]
    %v1248 = vld [vmem:[#allocation6] sm:$0xff]
    %v1249 = vld [vmem:[#allocation6 + $0x8] sm:$0xff]
    %v1250 = vld [vmem:[#allocation6 + $0x10] sm:$0xff]
    %v1251 = vld [vmem:[#allocation6 + $0x18] sm:$0xff]
    %v1252 = vperm.slane %v1247, 0
    %v1253 = vmul.f32 %v1248, %v1252
    %v1254 = vmul.f32 %v1249, %v1252
    %v1255 = vmul.f32 %v1250, %v1252
    %v1256 = vmul.f32 %v1251, %v1252
    %v1257 = vsel %vm33, %v1253, 0.0
    %1258 = vadd.xlane.f32.xlu0 %v1257
    %v1259 = vpop.xlane.xlu0 %1258
    %v1260 = vsel %vm33, %v1254, 0.0
    %1261 = vadd.xlane.f32.xlu0 %v1260
    %v1262 = vpop.xlane.xlu0 %1261
    %v1263 = vsel %vm33, %v1255, 0.0
    %1264 = vadd.xlane.f32.xlu0 %v1263
    %v1265 = vpop.xlane.xlu0 %1264
    %v1266 = vsel %vm33, %v1256, 0.0
    %1267 = vadd.xlane.f32.xlu0 %v1266
    %v1268 = vpop.xlane.xlu0 %1267
    %v1269 = vmul.f32 %v1259, %v1252
    %v1270 = vmul.f32 %v1262, %v1252
    %v1271 = vmul.f32 %v1265, %v1252
    %v1272 = vmul.f32 %v1268, %v1252
    %v1273 = vsub.f32 %v1248, %v1269
    %v1274 = vsub.f32 %v1249, %v1270
    %v1275 = vsub.f32 %v1250, %v1271
    %v1276 = vsub.f32 %v1251, %v1272
    %1277 = vst.msk [vmem:[#allocation6] sm:$0xff] %vm33, %v1273
    %1278 = vst.msk [vmem:[#allocation6 + $0x8] sm:$0xff] %vm33, %v1274
    %1279 = vst.msk [vmem:[#allocation6 + $0x10] sm:$0xff] %vm33, %v1275
    %1280 = vst.msk [vmem:[#allocation6 + $0x18] sm:$0xff] %vm33, %v1276
    // Predicated region
    $region10: #{tpu_custom_call.1} parent=1 // pred_check
      _
    $region11: #{tpu_custom_call.1} parent=1 // pred_check_branch
      %1282 = sbr.rel (0) target = $region13
    $region12: #{tpu_custom_call.1} parent=1 // pred_region
      %1284 = vsyncadd [#allocation5], 0
      %s1285 = sshll.u32 [#allocation6], 4
      %s1286 = int_to_ptr.vmem [resolvable:$true] %s1285
      %s1287 = sshll.u32 %s1, 4
      %s1288 = int_to_ptr.hbm [resolvable:$true] %s1287
      %1293 = dma.vmem_to_hbm [thread:$0]  %s1286, 512, %s1288, [#allocation5], 128, 128, 8
    $region13: #{tpu_custom_call.1} parent=1 // pred_fallthru
      _
    // Predicated region
    $region14: #{tpu_custom_call.1} parent=1 // pred_check
      _
    $region15: #{tpu_custom_call.1} parent=1 // pred_check_branch
      %1295 = sbr.rel (0) target = $region17
    $region16: #{tpu_custom_call.1} parent=1 // pred_region
      %1297 = dma.done [#allocation5], 512
    $region17: #{tpu_custom_call.1} parent=1 // pred_fallthru
      _
    %1298 = vsyncpa [#allocation4], 1
    %1299 = vsyncpa [#allocation5], 1

</llo_original>
